<compile_context>
chip_gen: v7x
topology: tpu7x:2x2x1
jax: 0.10.0
libtpu: 0.0.40
codegen_flags: <defaults>
</compile_context>

<pallas_src>
import functools
import math

import jax
import jax.numpy as jnp
import numpy as np
from jax.experimental import pallas as pl
from jax.experimental.pallas import tpu as pltpu


def _attention_block_kernel(x_ref, wqkv_ref, bqkv_ref, wo_ref, bo_ref,
                            gamma_ref, beta_ref, o_ref, *,
                            num_heads, head_dim, eps):
    H, D = num_heads, head_dim
    S, E = x_ref.shape[1], x_ref.shape[2]
    mm_dtype = wqkv_ref.dtype                     # bf16 in production, f32 for tight test

    x_f32 = x_ref[0].astype(jnp.float32)          # (S, E) residual / LayerNorm path
    x_mm = x_f32.astype(mm_dtype)                 # MXU input dtype

    # ---- Fused QKV projection: one head-batched MXU contraction -------------
    # wqkv is (H, E, 3D) with the 1/sqrt(D) scale pre-folded into the Q slice.
    xh = jnp.broadcast_to(x_mm, (H, S, E))
    qkv = jnp.einsum("hse,hed->hsd", xh, wqkv_ref[...],
                     preferred_element_type=jnp.float32)          # (H, S, 3D)
    qkv = qkv + bqkv_ref[...].astype(jnp.float32)

    q = qkv[..., 0 * D:1 * D]                     # (H, S, D), already scaled
    k = qkv[..., 1 * D:2 * D]
    v = qkv[..., 2 * D:3 * D]

    # ---- Scaled dot-product attention, batched over heads -------------------
    s = jnp.einsum("hsd,htd->hst", q.astype(mm_dtype), k.astype(mm_dtype),
                   preferred_element_type=jnp.float32)            # (H, S, S)
    s = s - jnp.max(s, axis=-1, keepdims=True)
    p = jnp.exp(s)                                                # EUP
    denom = jnp.sum(p, axis=-1, keepdims=True)
    r = pl.reciprocal(denom, approx=True)                         # EUP seed
    r = r * (2.0 - denom * r)                     # 1 Newton step -> ~f32, no VALU divide
    p = p * r

    o = jnp.einsum("hst,htd->hsd", p.astype(mm_dtype), v.astype(mm_dtype),
                   preferred_element_type=jnp.float32)            # (H, S, D)

    # ---- Output projection: per-head slab matmul, summed over heads ---------
    attn = jnp.einsum("hsd,hde->hse", o.astype(mm_dtype), wo_ref[...],
                      preferred_element_type=jnp.float32)         # (H, S, E)
    attn = jnp.sum(attn, axis=0) + bo_ref[0].astype(jnp.float32)  # (S, E)

    # ---- Residual (dropout == identity, eval) + LayerNorm (f32) -------------
    y = x_f32 + attn
    mu = jnp.mean(y, axis=-1, keepdims=True)
    var = jnp.mean((y - mu) ** 2, axis=-1, keepdims=True)
    yn = (y - mu) * jax.lax.rsqrt(var + eps)
    o_ref[0] = (yn * gamma_ref[0] + beta_ref[0]).astype(o_ref.dtype)


def prepare_params(params, num_heads, *, matmul_dtype=jnp.bfloat16):
    """One-time weight preparation (hoisted out of the per-call path)."""
    E = params["out_proj_weight"].shape[0]
    H = num_heads
    assert E % H == 0, "hidden_size must be divisible by num_heads"
    D = E // H
    scale = 1.0 / math.sqrt(D)

    in_w = params["in_proj_weight"]               # (3E, E), rows = [Wq; Wk; Wv]
    in_b = params["in_proj_bias"]                 # (3E,)
    wq = in_w[0 * E:1 * E].T * scale              # fold 1/sqrt(D) into Q projection
    wk = in_w[1 * E:2 * E].T
    wv = in_w[2 * E:3 * E].T
    bq = in_b[0 * E:1 * E] * scale
    bk = in_b[1 * E:2 * E]
    bv = in_b[2 * E:3 * E]

    def heads_first(w):                           # (E, E) -> (H, E, D)
        return jnp.transpose(w.reshape(E, H, D), (1, 0, 2))

    wqkv = jnp.concatenate([heads_first(wq), heads_first(wk), heads_first(wv)],
                           axis=-1)               # (H, E, 3D)
    bqkv = jnp.concatenate([bq.reshape(H, 1, D), bk.reshape(H, 1, D),
                            bv.reshape(H, 1, D)], axis=-1)        # (H, 1, 3D)
    wo = params["out_proj_weight"].T.reshape(H, D, E)             # (H, D, E)

    return {
        "wqkv": wqkv.astype(matmul_dtype),
        "bqkv": bqkv.astype(jnp.float32),
        "wo": wo.astype(matmul_dtype),
        "bo": params["out_proj_bias"].reshape(1, E).astype(jnp.float32),
        "gamma": params["ln_weight"].reshape(1, E).astype(jnp.float32),
        "beta": params["ln_bias"].reshape(1, E).astype(jnp.float32),
    }


def attention_block(x, prepared, *, num_heads, batch_first=False, eps=1e-5):
    """x: (S, B, E) like PyTorch's (L, N, E), or (B, S, E) if batch_first=True."""
    if not batch_first:
        x = jnp.transpose(x, (1, 0, 2))           # (S,B,E) -> (B,S,E)
    B, S, E = x.shape
    H = num_heads
    D = E // H

    kernel = functools.partial(_attention_block_kernel,
                               num_heads=H, head_dim=D, eps=eps)

    def resident(shape):                          # weights: DMAed once, stay in VMEM
        return pl.BlockSpec(shape, lambda b, _n=len(shape): (0,) * _n)

    out = pl.pallas_call(
        kernel,
        out_shape=jax.ShapeDtypeStruct((B, S, E), x.dtype),
        grid_spec=pltpu.PrefetchScalarGridSpec(
            num_scalar_prefetch=0,
            grid=(B,),
            in_specs=[
                pl.BlockSpec((1, S, E), lambda b: (b, 0, 0)),     # x (one batch/step)
                resident((H, E, 3 * D)),                          # fused QKV weight
                resident((H, 1, 3 * D)),                          # fused QKV bias
                resident((H, D, E)),                              # out-proj weight
                resident((1, E)),                                 # out-proj bias
                resident((1, E)),                                 # LN gamma
                resident((1, E)),                                 # LN beta
            ],
            # NOTE: with E < 128 the output stores are masked (vst.msk); for the
            # real model's hidden_size >= 128 they become lane-dense.
            out_specs=pl.BlockSpec((1, S, E), lambda b: (b, 0, 0)),
        ),
        compiler_params=pltpu.CompilerParams(
            dimension_semantics=("parallel",)),    # v7x: one batch per TensorCore
    )(x, prepared["wqkv"], prepared["bqkv"], prepared["wo"],
      prepared["bo"], prepared["gamma"], prepared["beta"])

    if not batch_first:
        out = jnp.transpose(out, (1, 0, 2))       # back to (S, B, E)
    return out


def _reference(x_sbe, params, *, num_heads):
    """Pure-JAX f32 reference mirroring PyTorch MultiheadAttention (eval mode)."""
    S, B, E = x_sbe.shape
    D = E // num_heads
    in_w = params["in_proj_weight"]
    in_b = params["in_proj_bias"]
    q = x_sbe @ in_w[0 * E:1 * E].T + in_b[0 * E:1 * E]
    k = x_sbe @ in_w[1 * E:2 * E].T + in_b[1 * E:2 * E]
    v = x_sbe @ in_w[2 * E:3 * E].T + in_b[2 * E:3 * E]

    def split_heads(t):  # (S, B, E) -> (B, H, S, D)
        return jnp.transpose(t.reshape(S, B, num_heads, D), (1, 2, 0, 3))

    qh, kh, vh = split_heads(q), split_heads(k), split_heads(v)
    scores = jnp.einsum("bhsd,bhtd->bhst", qh, kh) / math.sqrt(D)
    p = jax.nn.softmax(scores, axis=-1)
    o = jnp.einsum("bhst,bhtd->bhsd", p, vh)
    o = jnp.transpose(o, (2, 0, 1, 3)).reshape(S, B, E)
    attn = o @ params["out_proj_weight"].T + params["out_proj_bias"]
    y = x_sbe + attn
    mu = jnp.mean(y, axis=-1, keepdims=True)
    var = jnp.mean((y - mu) ** 2, axis=-1, keepdims=True)
    yn = (y - mu) / jnp.sqrt(var + 1e-5)
    return yn * params["ln_weight"] + params["ln_bias"]


if __name__ == "__main__":
    seq, batch, hidden, heads = 8, 2, 32, 4

    key = jax.random.PRNGKey(0)
    k_x, k_w, k_b, k_ow, k_ob = jax.random.split(key, 5)

    x = jax.random.normal(k_x, (seq, batch, hidden), dtype=jnp.float32)
    params = {
        "in_proj_weight": 0.1 * jax.random.normal(k_w, (3 * hidden, hidden), jnp.float32),
        "in_proj_bias": 0.01 * jax.random.normal(k_b, (3 * hidden,), jnp.float32),
        "out_proj_weight": 0.1 * jax.random.normal(k_ow, (hidden, hidden), jnp.float32),
        "out_proj_bias": 0.01 * jax.random.normal(k_ob, (hidden,), jnp.float32),
        "ln_weight": jnp.ones((hidden,), jnp.float32),
        "ln_bias": jnp.zeros((hidden,), jnp.float32),
    }

    ref = _reference(x, params, num_heads=heads)
    fwd = jax.jit(functools.partial(attention_block, num_heads=heads))

    # f32 MXU inputs: tight numerical check against the reference.
    prep_f32 = prepare_params(params, heads, matmul_dtype=jnp.float32)
    out_f32 = jax.block_until_ready(fwd(x, prep_f32))
    np.testing.assert_allclose(np.asarray(out_f32), np.asarray(ref),
                               rtol=5e-4, atol=5e-5)

    # bf16 MXU inputs (production path on v5e/v6e/v7x), f32 accumulation and
    # f32 softmax/LayerNorm: looser check.
    prep_bf16 = prepare_params(params, heads, matmul_dtype=jnp.bfloat16)
    out_bf16 = jax.block_until_ready(fwd(x, prep_bf16))
    np.testing.assert_allclose(np.asarray(out_bf16), np.asarray(ref),
                               rtol=3e-2, atol=3e-2)

    print("KERNEL_OK")
</pallas_src>

<mosaic_0001>
module attributes {stable_mosaic.version = 11 : i64} {
  func.func @_attention_block_kernel(%arg0: i32, %arg1: memref<1x8x32xf32, #tpu.memory_space<vmem>>, %arg2: memref<4x32x24xf32, #tpu.memory_space<vmem>>, %arg3: memref<4x1x24xf32, #tpu.memory_space<vmem>>, %arg4: memref<4x8x32xf32, #tpu.memory_space<vmem>>, %arg5: memref<1x32xf32, #tpu.memory_space<vmem>>, %arg6: memref<1x32xf32, #tpu.memory_space<vmem>>, %arg7: memref<1x32xf32, #tpu.memory_space<vmem>>, %arg8: memref<1x8x32xf32, #tpu.memory_space<vmem>>) attributes {dimension_semantics = [#tpu.dimension_semantics<parallel>], iteration_bounds = array<i64: 2>, scalar_prefetch = 0 : i64, scratch_operands = 0 : i64, tpu.core_type = #tpu.core_type<tc>, window_params = [{transform_indices = @transform_0, window_bounds = array<i64: 1, 8, 32>}, {pipeline_mode = #tpu.pipeline_mode<synchronous>, transform_indices = @transform_1, window_bounds = array<i64: 4, 32, 24>}, {pipeline_mode = #tpu.pipeline_mode<synchronous>, transform_indices = @transform_2, window_bounds = array<i64: 4, 1, 24>}, {pipeline_mode = #tpu.pipeline_mode<synchronous>, transform_indices = @transform_3, window_bounds = array<i64: 4, 8, 32>}, {pipeline_mode = #tpu.pipeline_mode<synchronous>, transform_indices = @transform_4, window_bounds = array<i64: 1, 32>}, {pipeline_mode = #tpu.pipeline_mode<synchronous>, transform_indices = @transform_5, window_bounds = array<i64: 1, 32>}, {pipeline_mode = #tpu.pipeline_mode<synchronous>, transform_indices = @transform_6, window_bounds = array<i64: 1, 32>}, {transform_indices = @transform_7, window_bounds = array<i64: 1, 8, 32>}]} {
    %c0 = arith.constant 0 : index
    %c0_0 = arith.constant 0 : index
    %c0_1 = arith.constant 0 : index
    %0 = vector.load %arg1[%c0, %c0_0, %c0_1] : memref<1x8x32xf32, #tpu.memory_space<vmem>>, vector<1x8x32xf32>
    %1 = vector.shape_cast %0 : vector<1x8x32xf32> to vector<8x32xf32>
    %2 = vector.shape_cast %1 : vector<8x32xf32> to vector<1x8x32xf32>
    %3 = vector.broadcast %2 : vector<1x8x32xf32> to vector<4x8x32xf32>
    %c0_2 = arith.constant 0 : index
    %c0_3 = arith.constant 0 : index
    %c0_4 = arith.constant 0 : index
    %4 = vector.load %arg2[%c0_2, %c0_3, %c0_4] : memref<4x32x24xf32, #tpu.memory_space<vmem>>, vector<4x32x24xf32>
    "tpu.trace_start"() <{level = 10 : i32, message = "hse,hed->hsd"}> : () -> ()
    %cst = arith.constant dense<0.000000e+00> : vector<4x8x24xf32>
    %5 = tpu.matmul %3, %4, %cst {dimension_numbers = #tpu.dot_dimension_numbers<[2], [1], [1], [2], [0, 0, 0, 1, 1, 2], [0], [0]>} : vector<4x8x32xf32>, vector<4x32x24xf32>, vector<4x8x24xf32> -> vector<4x8x24xf32>
    "tpu.trace_stop"() : () -> ()
    %c0_5 = arith.constant 0 : index
    %c0_6 = arith.constant 0 : index
    %c0_7 = arith.constant 0 : index
    %6 = vector.load %arg3[%c0_5, %c0_6, %c0_7] : memref<4x1x24xf32, #tpu.memory_space<vmem>>, vector<4x1x24xf32>
    %7 = vector.broadcast %6 : vector<4x1x24xf32> to vector<4x8x24xf32>
    %8 = arith.addf %5, %7 : vector<4x8x24xf32>
    %9 = vector.extract_strided_slice %8 {offsets = [0, 0, 0], sizes = [4, 8, 8], strides = [1, 1, 1]} : vector<4x8x24xf32> to vector<4x8x8xf32>
    %10 = vector.extract_strided_slice %8 {offsets = [0, 0, 8], sizes = [4, 8, 8], strides = [1, 1, 1]} : vector<4x8x24xf32> to vector<4x8x8xf32>
    %11 = vector.extract_strided_slice %8 {offsets = [0, 0, 16], sizes = [4, 8, 8], strides = [1, 1, 1]} : vector<4x8x24xf32> to vector<4x8x8xf32>
    "tpu.trace_start"() <{level = 10 : i32, message = "hsd,htd->hst"}> : () -> ()
    %cst_8 = arith.constant dense<0.000000e+00> : vector<4x8x8xf32>
    %12 = tpu.matmul %9, %10, %cst_8 {dimension_numbers = #tpu.dot_dimension_numbers<[2], [2], [1], [1], [0, 0, 0, 1, 1, 1], [0], [0]>} : vector<4x8x8xf32>, vector<4x8x8xf32>, vector<4x8x8xf32> -> vector<4x8x8xf32>
    "tpu.trace_stop"() : () -> ()
    %cst_9 = arith.constant dense<0xFF800000> : vector<4x8xf32>
    %13 = vector.multi_reduction <maximumf>, %12, %cst_9 [2] : vector<4x8x8xf32> to vector<4x8xf32>
    %14 = vector.shape_cast %13 : vector<4x8xf32> to vector<4x8x1xf32>
    %15 = vector.broadcast %14 : vector<4x8x1xf32> to vector<4x8x8xf32>
    %16 = arith.subf %12, %15 : vector<4x8x8xf32>
    %17 = math.exp %16 : vector<4x8x8xf32>
    %cst_10 = arith.constant dense<0.000000e+00> : vector<4x8xf32>
    %18 = vector.multi_reduction <add>, %17, %cst_10 [2] : vector<4x8x8xf32> to vector<4x8xf32>
    %19 = vector.shape_cast %18 : vector<4x8xf32> to vector<4x8x1xf32>
    %20 = tpu.reciprocal %19 {approx = true} : vector<4x8x1xf32> -> vector<4x8x1xf32>
    %21 = arith.mulf %19, %20 : vector<4x8x1xf32>
    %cst_11 = arith.constant 2.000000e+00 : f32
    %22 = vector.broadcast %cst_11 : f32 to vector<4x8x1xf32>
    %23 = arith.subf %22, %21 : vector<4x8x1xf32>
    %24 = arith.mulf %20, %23 : vector<4x8x1xf32>
    %25 = vector.broadcast %24 : vector<4x8x1xf32> to vector<4x8x8xf32>
    %26 = arith.mulf %17, %25 : vector<4x8x8xf32>
    "tpu.trace_start"() <{level = 10 : i32, message = "hst,htd->hsd"}> : () -> ()
    %cst_12 = arith.constant dense<0.000000e+00> : vector<4x8x8xf32>
    %27 = tpu.matmul %26, %11, %cst_12 {dimension_numbers = #tpu.dot_dimension_numbers<[2], [1], [1], [2], [0, 0, 0, 1, 1, 2], [0], [0]>} : vector<4x8x8xf32>, vector<4x8x8xf32>, vector<4x8x8xf32> -> vector<4x8x8xf32>
    "tpu.trace_stop"() : () -> ()
    %c0_13 = arith.constant 0 : index
    %c0_14 = arith.constant 0 : index
    %c0_15 = arith.constant 0 : index
    %28 = vector.load %arg4[%c0_13, %c0_14, %c0_15] : memref<4x8x32xf32, #tpu.memory_space<vmem>>, vector<4x8x32xf32>
    "tpu.trace_start"() <{level = 10 : i32, message = "hsd,hde->hse"}> : () -> ()
    %cst_16 = arith.constant dense<0.000000e+00> : vector<4x8x32xf32>
    %29 = tpu.matmul %27, %28, %cst_16 {dimension_numbers = #tpu.dot_dimension_numbers<[2], [1], [1], [2], [0, 0, 0, 1, 1, 2], [0], [0]>} : vector<4x8x8xf32>, vector<4x8x32xf32>, vector<4x8x32xf32> -> vector<4x8x32xf32>
    "tpu.trace_stop"() : () -> ()
    %cst_17 = arith.constant dense<0.000000e+00> : vector<8x32xf32>
    %30 = vector.multi_reduction <add>, %29, %cst_17 [0] : vector<4x8x32xf32> to vector<8x32xf32>
    %c0_18 = arith.constant 0 : index
    %c0_19 = arith.constant 0 : index
    %31 = vector.load %arg5[%c0_18, %c0_19] : memref<1x32xf32, #tpu.memory_space<vmem>>, vector<1x32xf32>
    %32 = vector.shape_cast %31 : vector<1x32xf32> to vector<32xf32>
    %33 = vector.shape_cast %32 : vector<32xf32> to vector<1x32xf32>
    %34 = vector.broadcast %33 : vector<1x32xf32> to vector<8x32xf32>
    %35 = arith.addf %30, %34 : vector<8x32xf32>
    %36 = arith.addf %1, %35 : vector<8x32xf32>
    %cst_20 = arith.constant dense<0.000000e+00> : vector<8xf32>
    %37 = vector.multi_reduction <add>, %36, %cst_20 [1] : vector<8x32xf32> to vector<8xf32>
    %38 = vector.shape_cast %37 : vector<8xf32> to vector<8x1xf32>
    %cst_21 = arith.constant 3.200000e+01 : f32
    %39 = vector.broadcast %cst_21 : f32 to vector<8x1xf32>
    %40 = arith.divf %38, %39 : vector<8x1xf32>
    %41 = vector.broadcast %40 : vector<8x1xf32> to vector<8x32xf32>
    %42 = arith.subf %36, %41 : vector<8x32xf32>
    %43 = arith.mulf %42, %42 : vector<8x32xf32>
    %cst_22 = arith.constant dense<0.000000e+00> : vector<8xf32>
    %44 = vector.multi_reduction <add>, %43, %cst_22 [1] : vector<8x32xf32> to vector<8xf32>
    %45 = vector.shape_cast %44 : vector<8xf32> to vector<8x1xf32>
    %cst_23 = arith.constant 3.200000e+01 : f32
    %46 = vector.broadcast %cst_23 : f32 to vector<8x1xf32>
    %47 = arith.divf %45, %46 : vector<8x1xf32>
    %48 = vector.broadcast %40 : vector<8x1xf32> to vector<8x32xf32>
    %49 = arith.subf %36, %48 : vector<8x32xf32>
    %cst_24 = arith.constant 9.99999974E-6 : f32
    %50 = vector.broadcast %cst_24 : f32 to vector<8x1xf32>
    %51 = arith.addf %47, %50 : vector<8x1xf32>
    %52 = math.rsqrt %51 : vector<8x1xf32>
    %53 = vector.broadcast %52 : vector<8x1xf32> to vector<8x32xf32>
    %54 = arith.mulf %49, %53 : vector<8x32xf32>
    %c0_25 = arith.constant 0 : index
    %c0_26 = arith.constant 0 : index
    %55 = vector.load %arg6[%c0_25, %c0_26] : memref<1x32xf32, #tpu.memory_space<vmem>>, vector<1x32xf32>
    %56 = vector.shape_cast %55 : vector<1x32xf32> to vector<32xf32>
    %57 = vector.shape_cast %56 : vector<32xf32> to vector<1x32xf32>
    %58 = vector.broadcast %57 : vector<1x32xf32> to vector<8x32xf32>
    %59 = arith.mulf %54, %58 : vector<8x32xf32>
    %c0_27 = arith.constant 0 : index
    %c0_28 = arith.constant 0 : index
    %60 = vector.load %arg7[%c0_27, %c0_28] : memref<1x32xf32, #tpu.memory_space<vmem>>, vector<1x32xf32>
    %61 = vector.shape_cast %60 : vector<1x32xf32> to vector<32xf32>
    %62 = vector.shape_cast %61 : vector<32xf32> to vector<1x32xf32>
    %63 = vector.broadcast %62 : vector<1x32xf32> to vector<8x32xf32>
    %64 = arith.addf %59, %63 : vector<8x32xf32>
    %c0_29 = arith.constant 0 : index
    %c0_30 = arith.constant 0 : index
    %c0_31 = arith.constant 0 : index
    %65 = vector.load %arg8[%c0_29, %c0_30, %c0_31] : memref<1x8x32xf32, #tpu.memory_space<vmem>>, vector<1x8x32xf32>
    %66 = vector.shape_cast %65 : vector<1x8x32xf32> to vector<8x32xf32>
    %67 = vector.shape_cast %64 : vector<8x32xf32> to vector<1x8x32xf32>
    tpu.vector_store %arg8[%c0_29, %c0_30, %c0_31], %67 {strides = array<i32>} : memref<1x8x32xf32, #tpu.memory_space<vmem>>, vector<1x8x32xf32>,
    return
  }
  func.func @transform_0(%arg0: i32) -> (i32, i32, i32) {
    %c0_i32 = arith.constant 0 : i32
    %c0_i32_0 = arith.constant 0 : i32
    %c0_i32_1 = arith.constant 0 : i32
    return %arg0, %c0_i32, %c0_i32_0 : i32, i32, i32
  }
  func.func @transform_1(%arg0: i32) -> (i32, i32, i32) {
    %c0_i32 = arith.constant 0 : i32
    %c0_i32_0 = arith.constant 0 : i32
    %c0_i32_1 = arith.constant 0 : i32
    %c0_i32_2 = arith.constant 0 : i32
    return %c0_i32, %c0_i32_0, %c0_i32_1 : i32, i32, i32
  }
  func.func @transform_2(%arg0: i32) -> (i32, i32, i32) {
    %c0_i32 = arith.constant 0 : i32
    %c0_i32_0 = arith.constant 0 : i32
    %c0_i32_1 = arith.constant 0 : i32
    %c0_i32_2 = arith.constant 0 : i32
    return %c0_i32, %c0_i32_0, %c0_i32_1 : i32, i32, i32
  }
  func.func @transform_3(%arg0: i32) -> (i32, i32, i32) {
    %c0_i32 = arith.constant 0 : i32
    %c0_i32_0 = arith.constant 0 : i32
    %c0_i32_1 = arith.constant 0 : i32
    %c0_i32_2 = arith.constant 0 : i32
    return %c0_i32, %c0_i32_0, %c0_i32_1 : i32, i32, i32
  }
  func.func @transform_4(%arg0: i32) -> (i32, i32) {
    %c0_i32 = arith.constant 0 : i32
    %c0_i32_0 = arith.constant 0 : i32
    %c0_i32_1 = arith.constant 0 : i32
    return %c0_i32, %c0_i32_0 : i32, i32
  }
  func.func @transform_5(%arg0: i32) -> (i32, i32) {
    %c0_i32 = arith.constant 0 : i32
    %c0_i32_0 = arith.constant 0 : i32
    %c0_i32_1 = arith.constant 0 : i32
    return %c0_i32, %c0_i32_0 : i32, i32
  }
  func.func @transform_6(%arg0: i32) -> (i32, i32) {
    %c0_i32 = arith.constant 0 : i32
    %c0_i32_0 = arith.constant 0 : i32
    %c0_i32_1 = arith.constant 0 : i32
    return %c0_i32, %c0_i32_0 : i32, i32
  }
  func.func @transform_7(%arg0: i32) -> (i32, i32, i32) {
    %c0_i32 = arith.constant 0 : i32
    %c0_i32_0 = arith.constant 0 : i32
    %c0_i32_1 = arith.constant 0 : i32
    return %arg0, %c0_i32, %c0_i32_0 : i32, i32, i32
  }
}

</mosaic_0001>

<llo_original>
// kernel: attention_block.1
$region0: #{attention_block.1}
  #allocation0 [shape = 'u32[]', space=smem, size = 0x4, offset = 0x4, fixed_abs, tag = 'smem constant byte address 0x4 - core index']
  #allocation1 [shape = 'u32[144,128]{1,0:T(1,128)}', space=vmem, size = 0x12000, scoped, tag = 'internal scratch']
  %s0 = inlined_call_operand.vmem [shape: f32[2,8,32], index: 0, kind: input, shape index: {}]
  %s1 = inlined_call_operand.vmem [shape: f32[4,32,24], index: 1, kind: input, shape index: {}]
  %s2 = inlined_call_operand.vmem [shape: f32[4,1,24], index: 2, kind: input, shape index: {}]
  %s3 = inlined_call_operand.vmem [shape: f32[4,8,32], index: 3, kind: input, shape index: {}]
  %s4 = inlined_call_operand.vmem [shape: f32[1,32], index: 4, kind: input, shape index: {}]
  %s5 = inlined_call_operand.vmem [shape: f32[1,32], index: 5, kind: input, shape index: {}]
  %s6 = inlined_call_operand.vmem [shape: f32[1,32], index: 6, kind: input, shape index: {}]
  %s7 = inlined_call_operand.vmem [shape: f32[2,8,32], index: 7, kind: output, shape index: {}]
  %s8 = sld [smem:[#allocation0]]
  $region61: #{attention_block.1} parent=0
    _
  %s10 = ssub.s32 1, %s8
  %s11 = scalar_select 0, %s10, %s8
  loop: start=0, step=1, limit=4
  $region2: #{attention_block.1} parent=0 // loop_pre_header
    _
  $region3: #{attention_block.1} parent=0 // loop_header
    %s13 = sphi 0, %s17
    %p14 = scmp.ge.s32.totalorder %s13, 4
    %s23 = sphi 0, %s25
    %s26 = sphi 0, %s23
    %s27 = sphi 0, %s26
    %s43 = sphi 0, %s27
    %s47 = sphi 0, %s47
    %s49 = sphi 0, %s47
    %s50 = sphi 0, %s49
    %s64 = sphi 0, %s50
    %s68 = sphi 0, %s68
    %s70 = sphi 0, %s68
    %s71 = sphi 0, %s70
    %s85 = sphi 0, %s71
    %s89 = sphi 0, %s89
    %s91 = sphi 0, %s89
    %s92 = sphi 0, %s91
    %s106 = sphi 0, %s92
    %s110 = sphi 0, %s110
    %s112 = sphi 0, %s110
    %s113 = sphi 0, %s112
    %s127 = sphi 0, %s113
    %s131 = sphi 0, %s131
    %s133 = sphi 0, %s131
    %s134 = sphi 0, %s133
    %s148 = sphi 0, %s134
    %s152 = sphi 0, %s152
    %s154 = sphi 0, %s152
    %s155 = sphi 0, %s154
    %s169 = sphi 0, %s155
    %s175 = sphi 0, %s177
    %s178 = sphi 0, %s175
    %s179 = sphi 0, %s178
    %s195 = sphi 0, %s179
  $region4: #{attention_block.1} parent=0 // loop_header_branch
    %16 = sbr.rel (%p14) target = $region8
  $region5: #{attention_block.1} parent=0 // loop_body
    %s18 = ssub.s32 %s13, 1
    %s19 = ssub.s32 %s13, 2
    %s20 = sadd.s32 %s13, 1
    %s21 = ssub.s32 %s13, %s20
    %p22 = scmp.eq.s32.totalorder %s21, 0
    %s24 = sadd.s32 %s23, 1
    %s25 = scalar_select %p22, %s23, %s24
    %p28 = pneg %p22
    %p29 = scmp.eq.s32.totalorder %s13, 1
    %p30 = por %p28, %p29
    %p31 = scmp.ne.s32.totalorder %s23, %s26
    %p32 = scmp.eq.s32.totalorder %s13, 0
    %p33 = por %p31, %p32
    %p34 = scmp.ne.s32.totalorder %s23, %s26
    %p35 = scmp.eq.s32.totalorder %s18, 1
    %p36 = por %p34, %p35
    %p37 = scmp.ne.s32.totalorder %s26, %s27
    %p38 = scmp.eq.s32.totalorder %s18, 0
    %p39 = por %p37, %p38
    %p40 = scmp.ne.s32.totalorder %s26, %s27
    %p41 = scmp.eq.s32.totalorder %s19, 1
    %p42 = por %p40, %p41
    %p44 = scmp.ne.s32.totalorder %s27, %s43
    %p45 = scmp.eq.s32.totalorder %s19, 0
    %p46 = por %p44, %p45
    %s48 = sadd.s32 %s47, 1
    %p51 = scmp.eq.s32.totalorder %s13, 1
    %p52 = scmp.ne.s32.totalorder %s47, %s49
    %p53 = scmp.eq.s32.totalorder %s13, 0
    %p54 = por %p52, %p53
    %p55 = scmp.ne.s32.totalorder %s47, %s49
    %p56 = scmp.eq.s32.totalorder %s18, 1
    %p57 = por %p55, %p56
    %p58 = scmp.ne.s32.totalorder %s49, %s50
    %p59 = scmp.eq.s32.totalorder %s18, 0
    %p60 = por %p58, %p59
    %p61 = scmp.ne.s32.totalorder %s49, %s50
    %p62 = scmp.eq.s32.totalorder %s19, 1
    %p63 = por %p61, %p62
    %p65 = scmp.ne.s32.totalorder %s50, %s64
    %p66 = scmp.eq.s32.totalorder %s19, 0
    %p67 = por %p65, %p66
    %s69 = sadd.s32 %s68, 1
    %p72 = scmp.eq.s32.totalorder %s13, 1
    %p73 = scmp.ne.s32.totalorder %s68, %s70
    %p74 = scmp.eq.s32.totalorder %s13, 0
    %p75 = por %p73, %p74
    %p76 = scmp.ne.s32.totalorder %s68, %s70
    %p77 = scmp.eq.s32.totalorder %s18, 1
    %p78 = por %p76, %p77
    %p79 = scmp.ne.s32.totalorder %s70, %s71
    %p80 = scmp.eq.s32.totalorder %s18, 0
    %p81 = por %p79, %p80
    %p82 = scmp.ne.s32.totalorder %s70, %s71
    %p83 = scmp.eq.s32.totalorder %s19, 1
    %p84 = por %p82, %p83
    %p86 = scmp.ne.s32.totalorder %s71, %s85
    %p87 = scmp.eq.s32.totalorder %s19, 0
    %p88 = por %p86, %p87
    %s90 = sadd.s32 %s89, 1
    %p93 = scmp.eq.s32.totalorder %s13, 1
    %p94 = scmp.ne.s32.totalorder %s89, %s91
    %p95 = scmp.eq.s32.totalorder %s13, 0
    %p96 = por %p94, %p95
    %p97 = scmp.ne.s32.totalorder %s89, %s91
    %p98 = scmp.eq.s32.totalorder %s18, 1
    %p99 = por %p97, %p98
    %p100 = scmp.ne.s32.totalorder %s91, %s92
    %p101 = scmp.eq.s32.totalorder %s18, 0
    %p102 = por %p100, %p101
    %p103 = scmp.ne.s32.totalorder %s91, %s92
    %p104 = scmp.eq.s32.totalorder %s19, 1
    %p105 = por %p103, %p104
    %p107 = scmp.ne.s32.totalorder %s92, %s106
    %p108 = scmp.eq.s32.totalorder %s19, 0
    %p109 = por %p107, %p108
    %s111 = sadd.s32 %s110, 1
    %p114 = scmp.eq.s32.totalorder %s13, 1
    %p115 = scmp.ne.s32.totalorder %s110, %s112
    %p116 = scmp.eq.s32.totalorder %s13, 0
    %p117 = por %p115, %p116
    %p118 = scmp.ne.s32.totalorder %s110, %s112
    %p119 = scmp.eq.s32.totalorder %s18, 1
    %p120 = por %p118, %p119
    %p121 = scmp.ne.s32.totalorder %s112, %s113
    %p122 = scmp.eq.s32.totalorder %s18, 0
    %p123 = por %p121, %p122
    %p124 = scmp.ne.s32.totalorder %s112, %s113
    %p125 = scmp.eq.s32.totalorder %s19, 1
    %p126 = por %p124, %p125
    %p128 = scmp.ne.s32.totalorder %s113, %s127
    %p129 = scmp.eq.s32.totalorder %s19, 0
    %p130 = por %p128, %p129
    %s132 = sadd.s32 %s131, 1
    %p135 = scmp.eq.s32.totalorder %s13, 1
    %p136 = scmp.ne.s32.totalorder %s131, %s133
    %p137 = scmp.eq.s32.totalorder %s13, 0
    %p138 = por %p136, %p137
    %p139 = scmp.ne.s32.totalorder %s131, %s133
    %p140 = scmp.eq.s32.totalorder %s18, 1
    %p141 = por %p139, %p140
    %p142 = scmp.ne.s32.totalorder %s133, %s134
    %p143 = scmp.eq.s32.totalorder %s18, 0
    %p144 = por %p142, %p143
    %p145 = scmp.ne.s32.totalorder %s133, %s134
    %p146 = scmp.eq.s32.totalorder %s19, 1
    %p147 = por %p145, %p146
    %p149 = scmp.ne.s32.totalorder %s134, %s148
    %p150 = scmp.eq.s32.totalorder %s19, 0
    %p151 = por %p149, %p150
    %s153 = sadd.s32 %s152, 1
    %p156 = scmp.eq.s32.totalorder %s13, 1
    %p157 = scmp.ne.s32.totalorder %s152, %s154
    %p158 = scmp.eq.s32.totalorder %s13, 0
    %p159 = por %p157, %p158
    %p160 = scmp.ne.s32.totalorder %s152, %s154
    %p161 = scmp.eq.s32.totalorder %s18, 1
    %p162 = por %p160, %p161
    %p163 = scmp.ne.s32.totalorder %s154, %s155
    %p164 = scmp.eq.s32.totalorder %s18, 0
    %p165 = por %p163, %p164
    %p166 = scmp.ne.s32.totalorder %s154, %s155
    %p167 = scmp.eq.s32.totalorder %s19, 1
    %p168 = por %p166, %p167
    %p170 = scmp.ne.s32.totalorder %s155, %s169
    %p171 = scmp.eq.s32.totalorder %s19, 0
    %p172 = por %p170, %p171
    %s173 = ssub.s32 %s13, %s20
    %p174 = scmp.eq.s32.totalorder %s173, 0
    %s176 = sadd.s32 %s175, 1
    %s177 = scalar_select %p174, %s175, %s176
    %p180 = pneg %p174
    %p181 = scmp.eq.s32.totalorder %s13, 1
    %p182 = por %p180, %p181
    %p183 = scmp.ne.s32.totalorder %s175, %s178
    %p184 = scmp.eq.s32.totalorder %s13, 0
    %p185 = por %p183, %p184
    %p186 = scmp.ne.s32.totalorder %s175, %s178
    %p187 = scmp.eq.s32.totalorder %s18, 1
    %p188 = por %p186, %p187
    %p189 = scmp.ne.s32.totalorder %s178, %s179
    %p190 = scmp.eq.s32.totalorder %s18, 0
    %p191 = por %p189, %p190
    %p192 = scmp.ne.s32.totalorder %s178, %s179
    %p193 = scmp.eq.s32.totalorder %s19, 1
    %p194 = por %p192, %p193
    %p196 = scmp.ne.s32.totalorder %s179, %s195
    %p197 = scmp.eq.s32.totalorder %s19, 0
    %p198 = por %p196, %p197
    %p199 = scmp.le.s32.totalorder 1, %s13
    %p200 = scmp.lt.s32.totalorder %s13, 3
    %p201 = pnand %p199, %p200
    %p202 = pneg %p201
    // Predicated region
    $region9: #{attention_block.1} parent=5 // pred_check
      _
    $region10: #{attention_block.1} parent=5 // pred_check_branch
      %204 = sbr.rel (%p201) target = $region12
    $region11: #{attention_block.1} parent=5 // pred_region
      %s205 = ssub.s32 %s13, 1
      // Predicated region
      $region13: #{attention_block.1} parent=11 // pred_check
        %p206 = pneg %p60
      $region14: #{attention_block.1} parent=11 // pred_check_branch
        %208 = sbr.rel (%p206) target = $region16
      $region15: #{attention_block.1} parent=11 // pred_region
        _
      $region16: #{attention_block.1} parent=11 // pred_fallthru
        _
      // Predicated region
      $region17: #{attention_block.1} parent=11 // pred_check
        %p209 = pneg %p81
      $region18: #{attention_block.1} parent=11 // pred_check_branch
        %211 = sbr.rel (%p209) target = $region20
      $region19: #{attention_block.1} parent=11 // pred_region
        _
      $region20: #{attention_block.1} parent=11 // pred_fallthru
        _
      // Predicated region
      $region21: #{attention_block.1} parent=11 // pred_check
        %p212 = pneg %p102
      $region22: #{attention_block.1} parent=11 // pred_check_branch
        %214 = sbr.rel (%p212) target = $region24
      $region23: #{attention_block.1} parent=11 // pred_region
        _
      $region24: #{attention_block.1} parent=11 // pred_fallthru
        _
      // Predicated region
      $region25: #{attention_block.1} parent=11 // pred_check
        %p215 = pneg %p123
      $region26: #{attention_block.1} parent=11 // pred_check_branch
        %217 = sbr.rel (%p215) target = $region28
      $region27: #{attention_block.1} parent=11 // pred_region
        _
      $region28: #{attention_block.1} parent=11 // pred_fallthru
        _
      // Predicated region
      $region29: #{attention_block.1} parent=11 // pred_check
        %p218 = pneg %p144
      $region30: #{attention_block.1} parent=11 // pred_check_branch
        %220 = sbr.rel (%p218) target = $region32
      $region31: #{attention_block.1} parent=11 // pred_region
        _
      $region32: #{attention_block.1} parent=11 // pred_fallthru
        _
      // Predicated region
      $region33: #{attention_block.1} parent=11 // pred_check
        %p221 = pneg %p165
      $region34: #{attention_block.1} parent=11 // pred_check_branch
        %223 = sbr.rel (%p221) target = $region36
      $region35: #{attention_block.1} parent=11 // pred_region
        _
      $region36: #{attention_block.1} parent=11 // pred_fallthru
        _
    $region12: #{attention_block.1} parent=5 // pred_fallthru
      _
    %p224 = scmp.lt.s32.totalorder %s13, 2
    // Predicated region
    $region37: #{attention_block.1} parent=5 // pred_check
      %p225 = pneg %p224
    $region38: #{attention_block.1} parent=5 // pred_check_branch
      %227 = sbr.rel (%p225) target = $region40
    $region39: #{attention_block.1} parent=5 // pred_region
      // Predicated region
      $region41: #{attention_block.1} parent=39 // pred_check
        %p228 = pneg %p33
      $region42: #{attention_block.1} parent=39 // pred_check_branch
        %230 = sbr.rel (%p228) target = $region44
      $region43: #{attention_block.1} parent=39 // pred_region
        %p231 = scmp.lt.s32.totalorder %s13, 1
        %s232 = scalar_select %p231, %s13, 1
        %s233 = smul.addr %s232, 8
        %s234 = scalar_lea.vmem %s0, %s233
      $region44: #{attention_block.1} parent=39 // pred_fallthru
        _
    $region40: #{attention_block.1} parent=5 // pred_fallthru
      _
    %p235 = scmp.le.s32.totalorder 1, %s13
    %p236 = scmp.lt.s32.totalorder %s13, 3
    %p237 = pnand %p235, %p236
    %p238 = pneg %p237
    // Predicated region
    $region45: #{attention_block.1} parent=5 // pred_check
      _
    $region46: #{attention_block.1} parent=5 // pred_check_branch
      %240 = sbr.rel (%p237) target = $region48
    $region47: #{attention_block.1} parent=5 // pred_region
      %s241 = ssub.s32 %s13, 1
      %p242 = scmp.lt.s32.totalorder %s18, 1
      %s243 = scalar_select %p242, %s18, 1
      %s244 = smul.addr %s243, 8
      %s245 = scalar_lea.vmem %s0, %s244
      %p246 = pneg %p39
      %p247 = pneg %p36
      %p248 = pneg %p60
      %p249 = pneg %p57
      %p250 = pneg %p81
      %p251 = pneg %p78
      %p252 = pneg %p102
      %p253 = pneg %p99
      %p254 = pneg %p123
      %p255 = pneg %p120
      %p256 = pneg %p144
      %p257 = pneg %p141
      %p258 = pneg %p165
      %p259 = pneg %p162
      %p260 = pneg %p191
      %p261 = pneg %p188
      %p262 = scmp.lt.s32.totalorder %s18, 1
      %s263 = scalar_select %p262, %s18, 1
      %s264 = smul.addr %s263, 8
      %s265 = scalar_lea.vmem %s7, %s264
      %p266 = scmp.lt.s32.totalorder %s18, 1
      %s267 = scalar_select %p266, %s18, 1
      %s268 = smul.addr %s267, 8
      %s269 = scalar_lea.vmem %s0, %s268
      %p270 = scmp.lt.s32.totalorder %s18, 1
      %s271 = scalar_select %p270, %s18, 1
      %s272 = smul.addr %s271, 8
      %s273 = scalar_lea.vmem %s7, %s272
      %v274 = vld [vmem:[%s269] sm:$0xff]
      %v275 = vld [vmem:[%s1] sm:$0xff]
      %v276 = vld [vmem:[%s1 + $0x8] sm:$0xff]
      %v277 = vld [vmem:[%s1 + $0x10] sm:$0xff]
      %v278 = vld [vmem:[%s1 + $0x18] sm:$0xff]
      %v279 = vld [vmem:[%s1 + $0x20] sm:$0xff]
      %v280 = vld [vmem:[%s1 + $0x28] sm:$0xff]
      %v281 = vld [vmem:[%s1 + $0x30] sm:$0xff]
      %v282 = vld [vmem:[%s1 + $0x38] sm:$0xff]
      %v283 = vld [vmem:[%s1 + $0x40] sm:$0xff]
      %v284 = vld [vmem:[%s1 + $0x48] sm:$0xff]
      %v285 = vld [vmem:[%s1 + $0x50] sm:$0xff]
      %v286 = vld [vmem:[%s1 + $0x58] sm:$0xff]
      %v287 = vld [vmem:[%s1 + $0x60] sm:$0xff]
      %v288 = vld [vmem:[%s1 + $0x68] sm:$0xff]
      %v289 = vld [vmem:[%s1 + $0x70] sm:$0xff]
      %v290 = vld [vmem:[%s1 + $0x78] sm:$0xff]
      %v291 = vld [vmem:[%s2] sm:$0x1]
      %v292 = vld [vmem:[%s2 + $0x1] sm:$0x1]
      %v293 = vld [vmem:[%s2 + $0x2] sm:$0x1]
      %v294 = vld [vmem:[%s2 + $0x3] sm:$0x1]
      %v299 = vlaneseq
      %v300 = vshrl.u32 %v299, 7
      %v301 = vsub.s32 0, %v300
      %v302 = vrot.slane %v291, %v301
      %v303 = vlaneseq
      %v304 = vshrl.u32 %v303, 7
      %v305 = vsub.s32 0, %v304
      %v306 = vrot.slane %v292, %v305
      %v307 = vlaneseq
      %v308 = vshrl.u32 %v307, 7
      %v309 = vsub.s32 0, %v308
      %v310 = vrot.slane %v293, %v309
      %v311 = vlaneseq
      %v312 = vshrl.u32 %v311, 7
      %v313 = vsub.s32 0, %v312
      %v314 = vrot.slane %v294, %v313
      %vm319 = vcmask 261120
      %v321 = vsel %vm319, %v274, 0
      %323 = vmatprep.subr.mxu0 0.0
      %324 = vmatpush1.msra.mxu0 %v275
      %325 = vmatprep.subr.mxu0 0.0
      %326 = vmatpush1.msra.mxu0 %v276
      %327 = vmatprep.subr.mxu0 0.0
      %328 = vmatpush1.msra.mxu0 %v277
      %329 = vmatprep.subr.mxu0 0.0
      %330 = vmatpush1.msra.mxu0 %v278
      %331 = vmatprep.subr.mxu0 0.0
      %332 = vmatpush1.msra.mxu0 0.0
      %333 = vmatprep.subr.mxu0 0.0
      %334 = vmatpush1.msra.mxu0 0.0
      %335 = vmatprep.subr.mxu0 0.0
      %336 = vmatpush1.msra.mxu0 0.0
      %337 = vmatprep.subr.mxu0 0.0
      %338 = vmatpush1.msra.mxu0 0.0
      %339 = vmatprep.subr.mxu0 0.0
      %340 = vmatpush1.msra.mxu0 0.0
      %341 = vmatprep.subr.mxu0 0.0
      %342 = vmatpush1.msra.mxu0 0.0
      %343 = vmatprep.subr.mxu0 0.0
      %344 = vmatpush1.msra.mxu0 0.0
      %345 = vmatprep.subr.mxu0 0.0
      %346 = vmatpush1.msra.mxu0 0.0
      %347 = vmatprep.subr.mxu0 0.0
      %348 = vmatpush1.msra.mxu0 0.0
      %349 = vmatprep.subr.mxu0 0.0
      %350 = vmatpush1.msra.mxu0 0.0
      %351 = vmatprep.subr.mxu0 0.0
      %352 = vmatpush1.msra.mxu0 0.0
      %353 = vmatprep.subr.mxu0 0.0
      %354 = vmatpush1.msra.mxu0 0.0
      %355 = vmatprep.subr.mxu0 0.0
      %356 = vmatpush1.msra.mxu0 0.0
      %357 = vmatprep.subr.mxu0 0.0
      %358 = vmatpush1.msra.mxu0 0.0
      %359 = vmatprep.subr.mxu0 0.0
      %360 = vmatpush1.msra.mxu0 0.0
      %361 = vmatprep.subr.mxu0 0.0
      %362 = vmatpush1.msra.mxu0 0.0
      %363 = vmatprep.subr.mxu0 0.0
      %364 = vmatpush1.msra.mxu0 0.0
      %365 = vmatprep.subr.mxu0 0.0
      %366 = vmatpush1.msra.mxu0 0.0
      %367 = vmatprep.subr.mxu0 0.0
      %368 = vmatpush1.msra.mxu0 0.0
      %369 = vmatprep.subr.mxu0 0.0
      %370 = vmatpush1.msra.mxu0 0.0
      %371 = vmatprep.subr.mxu0 0.0
      %372 = vmatpush1.msra.mxu0 0.0
      %373 = vmatprep.subr.mxu0 0.0
      %374 = vmatpush1.msra.mxu0 0.0
      %375 = vmatprep.subr.mxu0 0.0
      %376 = vmatpush1.msra.mxu0 0.0
      %377 = vmatprep.subr.mxu0 0.0
      %378 = vmatpush1.msra.mxu0 0.0
      %379 = vmatprep.subr.mxu0 0.0
      %380 = vmatpush1.msra.mxu0 0.0
      %381 = vmatprep.subr.mxu0 0.0
      %382 = vmatpush1.msra.mxu0 0.0
      %383 = vmatprep.subr.mxu0 0.0
      %384 = vmatpush1.msra.mxu0 0.0
      %385 = vmatprep.subr.mxu0 0.0
      %386 = vmatpush1.msra.mxu0 0.0
      %387 = vmatprep.mubr.f32.mxu0 0.0
      %388 = vmatmul.mubr.f32.gmra.mrb[0].mxu0 %v321
      %v389 = vpop.f32.mrb[0].mxu0
      %v390 = vadd.f32 %v302, %v389
      %v391 = vpop.f32.mrb[0].mxu0
      %392 = vdwg.mxu0
      %393 = vmatprep.subr.mxu0 0.0
      %394 = vmatpush1.msra.mxu0 %v279
      %395 = vmatprep.subr.mxu0 0.0
      %396 = vmatpush1.msra.mxu0 %v280
      %397 = vmatprep.subr.mxu0 0.0
      %398 = vmatpush1.msra.mxu0 %v281
      %399 = vmatprep.subr.mxu0 0.0
      %400 = vmatpush1.msra.mxu0 %v282
      %401 = vmatprep.subr.mxu0 0.0
      %402 = vmatpush1.msra.mxu0 0.0
      %403 = vmatprep.subr.mxu0 0.0
      %404 = vmatpush1.msra.mxu0 0.0
      %405 = vmatprep.subr.mxu0 0.0
      %406 = vmatpush1.msra.mxu0 0.0
      %407 = vmatprep.subr.mxu0 0.0
      %408 = vmatpush1.msra.mxu0 0.0
      %409 = vmatprep.subr.mxu0 0.0
      %410 = vmatpush1.msra.mxu0 0.0
      %411 = vmatprep.subr.mxu0 0.0
      %412 = vmatpush1.msra.mxu0 0.0
      %413 = vmatprep.subr.mxu0 0.0
      %414 = vmatpush1.msra.mxu0 0.0
      %415 = vmatprep.subr.mxu0 0.0
      %416 = vmatpush1.msra.mxu0 0.0
      %417 = vmatprep.subr.mxu0 0.0
      %418 = vmatpush1.msra.mxu0 0.0
      %419 = vmatprep.subr.mxu0 0.0
      %420 = vmatpush1.msra.mxu0 0.0
      %421 = vmatprep.subr.mxu0 0.0
      %422 = vmatpush1.msra.mxu0 0.0
      %423 = vmatprep.subr.mxu0 0.0
      %424 = vmatpush1.msra.mxu0 0.0
      %425 = vmatprep.subr.mxu0 0.0
      %426 = vmatpush1.msra.mxu0 0.0
      %427 = vmatprep.subr.mxu0 0.0
      %428 = vmatpush1.msra.mxu0 0.0
      %429 = vmatprep.subr.mxu0 0.0
      %430 = vmatpush1.msra.mxu0 0.0
      %431 = vmatprep.subr.mxu0 0.0
      %432 = vmatpush1.msra.mxu0 0.0
      %433 = vmatprep.subr.mxu0 0.0
      %434 = vmatpush1.msra.mxu0 0.0
      %435 = vmatprep.subr.mxu0 0.0
      %436 = vmatpush1.msra.mxu0 0.0
      %437 = vmatprep.subr.mxu0 0.0
      %438 = vmatpush1.msra.mxu0 0.0
      %439 = vmatprep.subr.mxu0 0.0
      %440 = vmatpush1.msra.mxu0 0.0
      %441 = vmatprep.subr.mxu0 0.0
      %442 = vmatpush1.msra.mxu0 0.0
      %443 = vmatprep.subr.mxu0 0.0
      %444 = vmatpush1.msra.mxu0 0.0
      %445 = vmatprep.subr.mxu0 0.0
      %446 = vmatpush1.msra.mxu0 0.0
      %447 = vmatprep.subr.mxu0 0.0
      %448 = vmatpush1.msra.mxu0 0.0
      %449 = vmatprep.subr.mxu0 0.0
      %450 = vmatpush1.msra.mxu0 0.0
      %451 = vmatprep.subr.mxu0 0.0
      %452 = vmatpush1.msra.mxu0 0.0
      %453 = vmatprep.subr.mxu0 0.0
      %454 = vmatpush1.msra.mxu0 0.0
      %455 = vmatprep.subr.mxu0 0.0
      %456 = vmatpush1.msra.mxu0 0.0
      %457 = vmatprep.mubr.f32.mxu0 0.0
      %458 = vmatmul.mubr.f32.gmra.mrb[0].mxu0 %v321
      %v459 = vpop.f32.mrb[0].mxu0
      %v460 = vadd.f32 %v306, %v459
      %v461 = vpop.f32.mrb[0].mxu0
      %462 = vdwg.mxu0
      %463 = vmatprep.subr.mxu0 0.0
      %464 = vmatpush1.msra.mxu0 %v283
      %465 = vmatprep.subr.mxu0 0.0
      %466 = vmatpush1.msra.mxu0 %v284
      %467 = vmatprep.subr.mxu0 0.0
      %468 = vmatpush1.msra.mxu0 %v285
      %469 = vmatprep.subr.mxu0 0.0
      %470 = vmatpush1.msra.mxu0 %v286
      %471 = vmatprep.subr.mxu0 0.0
      %472 = vmatpush1.msra.mxu0 0.0
      %473 = vmatprep.subr.mxu0 0.0
      %474 = vmatpush1.msra.mxu0 0.0
      %475 = vmatprep.subr.mxu0 0.0
      %476 = vmatpush1.msra.mxu0 0.0
      %477 = vmatprep.subr.mxu0 0.0
      %478 = vmatpush1.msra.mxu0 0.0
      %479 = vmatprep.subr.mxu0 0.0
      %480 = vmatpush1.msra.mxu0 0.0
      %481 = vmatprep.subr.mxu0 0.0
      %482 = vmatpush1.msra.mxu0 0.0
      %483 = vmatprep.subr.mxu0 0.0
      %484 = vmatpush1.msra.mxu0 0.0
      %485 = vmatprep.subr.mxu0 0.0
      %486 = vmatpush1.msra.mxu0 0.0
      %487 = vmatprep.subr.mxu0 0.0
      %488 = vmatpush1.msra.mxu0 0.0
      %489 = vmatprep.subr.mxu0 0.0
      %490 = vmatpush1.msra.mxu0 0.0
      %491 = vmatprep.subr.mxu0 0.0
      %492 = vmatpush1.msra.mxu0 0.0
      %493 = vmatprep.subr.mxu0 0.0
      %494 = vmatpush1.msra.mxu0 0.0
      %495 = vmatprep.subr.mxu0 0.0
      %496 = vmatpush1.msra.mxu0 0.0
      %497 = vmatprep.subr.mxu0 0.0
      %498 = vmatpush1.msra.mxu0 0.0
      %499 = vmatprep.subr.mxu0 0.0
      %500 = vmatpush1.msra.mxu0 0.0
      %501 = vmatprep.subr.mxu0 0.0
      %502 = vmatpush1.msra.mxu0 0.0
      %503 = vmatprep.subr.mxu0 0.0
      %504 = vmatpush1.msra.mxu0 0.0
      %505 = vmatprep.subr.mxu0 0.0
      %506 = vmatpush1.msra.mxu0 0.0
      %507 = vmatprep.subr.mxu0 0.0
      %508 = vmatpush1.msra.mxu0 0.0
      %509 = vmatprep.subr.mxu0 0.0
      %510 = vmatpush1.msra.mxu0 0.0
      %511 = vmatprep.subr.mxu0 0.0
      %512 = vmatpush1.msra.mxu0 0.0
      %513 = vmatprep.subr.mxu0 0.0
      %514 = vmatpush1.msra.mxu0 0.0
      %515 = vmatprep.subr.mxu0 0.0
      %516 = vmatpush1.msra.mxu0 0.0
      %517 = vmatprep.subr.mxu0 0.0
      %518 = vmatpush1.msra.mxu0 0.0
      %519 = vmatprep.subr.mxu0 0.0
      %520 = vmatpush1.msra.mxu0 0.0
      %521 = vmatprep.subr.mxu0 0.0
      %522 = vmatpush1.msra.mxu0 0.0
      %523 = vmatprep.subr.mxu0 0.0
      %524 = vmatpush1.msra.mxu0 0.0
      %525 = vmatprep.subr.mxu0 0.0
      %526 = vmatpush1.msra.mxu0 0.0
      %527 = vmatprep.mubr.f32.mxu0 0.0
      %528 = vmatmul.mubr.f32.gmra.mrb[0].mxu0 %v321
      %v529 = vpop.f32.mrb[0].mxu0
      %v530 = vadd.f32 %v310, %v529
      %v531 = vpop.f32.mrb[0].mxu0
      %532 = vdwg.mxu0
      %533 = vmatprep.subr.mxu0 0.0
      %534 = vmatpush1.msra.mxu0 %v287
      %535 = vmatprep.subr.mxu0 0.0
      %536 = vmatpush1.msra.mxu0 %v288
      %537 = vmatprep.subr.mxu0 0.0
      %538 = vmatpush1.msra.mxu0 %v289
      %539 = vmatprep.subr.mxu0 0.0
      %540 = vmatpush1.msra.mxu0 %v290
      %541 = vmatprep.subr.mxu0 0.0
      %542 = vmatpush1.msra.mxu0 0.0
      %543 = vmatprep.subr.mxu0 0.0
      %544 = vmatpush1.msra.mxu0 0.0
      %545 = vmatprep.subr.mxu0 0.0
      %546 = vmatpush1.msra.mxu0 0.0
      %547 = vmatprep.subr.mxu0 0.0
      %548 = vmatpush1.msra.mxu0 0.0
      %549 = vmatprep.subr.mxu0 0.0
      %550 = vmatpush1.msra.mxu0 0.0
      %551 = vmatprep.subr.mxu0 0.0
      %552 = vmatpush1.msra.mxu0 0.0
      %553 = vmatprep.subr.mxu0 0.0
      %554 = vmatpush1.msra.mxu0 0.0
      %555 = vmatprep.subr.mxu0 0.0
      %556 = vmatpush1.msra.mxu0 0.0
      %557 = vmatprep.subr.mxu0 0.0
      %558 = vmatpush1.msra.mxu0 0.0
      %559 = vmatprep.subr.mxu0 0.0
      %560 = vmatpush1.msra.mxu0 0.0
      %561 = vmatprep.subr.mxu0 0.0
      %562 = vmatpush1.msra.mxu0 0.0
      %563 = vmatprep.subr.mxu0 0.0
      %564 = vmatpush1.msra.mxu0 0.0
      %565 = vmatprep.subr.mxu0 0.0
      %566 = vmatpush1.msra.mxu0 0.0
      %567 = vmatprep.subr.mxu0 0.0
      %568 = vmatpush1.msra.mxu0 0.0
      %569 = vmatprep.subr.mxu0 0.0
      %570 = vmatpush1.msra.mxu0 0.0
      %571 = vmatprep.subr.mxu0 0.0
      %572 = vmatpush1.msra.mxu0 0.0
      %573 = vmatprep.subr.mxu0 0.0
      %574 = vmatpush1.msra.mxu0 0.0
      %575 = vmatprep.subr.mxu0 0.0
      %576 = vmatpush1.msra.mxu0 0.0
      %577 = vmatprep.subr.mxu0 0.0
      %578 = vmatpush1.msra.mxu0 0.0
      %579 = vmatprep.subr.mxu0 0.0
      %580 = vmatpush1.msra.mxu0 0.0
      %581 = vmatprep.subr.mxu0 0.0
      %582 = vmatpush1.msra.mxu0 0.0
      %583 = vmatprep.subr.mxu0 0.0
      %584 = vmatpush1.msra.mxu0 0.0
      %585 = vmatprep.subr.mxu0 0.0
      %586 = vmatpush1.msra.mxu0 0.0
      %587 = vmatprep.subr.mxu0 0.0
      %588 = vmatpush1.msra.mxu0 0.0
      %589 = vmatprep.subr.mxu0 0.0
      %590 = vmatpush1.msra.mxu0 0.0
      %591 = vmatprep.subr.mxu0 0.0
      %592 = vmatpush1.msra.mxu0 0.0
      %593 = vmatprep.subr.mxu0 0.0
      %594 = vmatpush1.msra.mxu0 0.0
      %595 = vmatprep.subr.mxu0 0.0
      %596 = vmatpush1.msra.mxu0 0.0
      %597 = vmatprep.mubr.f32.mxu0 0.0
      %598 = vmatmul.mubr.f32.gmra.mrb[0].mxu0 %v321
      %v599 = vpop.f32.mrb[0].mxu0
      %v600 = vadd.f32 %v314, %v599
      %v601 = vpop.f32.mrb[0].mxu0
      %602 = vdwg.mxu0
      %604 = vrot.lane.b32.xlu0 %v390, 120
      %v605 = vpop.permute.xlu0 %604
      %vm606 = vcmask 64512
      %v607 = vsel %vm606, %v390, 0
      %v609 = vsel %vm606, %v605, 0
      %611 = vmatprep.subr.mxu0 0.0
      %612 = vmatpush1.xpose.msra.mxu0 %v609
      %613 = vmatprep.subr.mxu0 0.0
      %614 = vmatpush1.xpose.msra.mxu0 0.0
      %615 = vmatprep.subr.mxu0 0.0
      %616 = vmatpush1.xpose.msra.mxu0 0.0
      %617 = vmatprep.subr.mxu0 0.0
      %618 = vmatpush1.xpose.msra.mxu0 0.0
      %619 = vmatprep.subr.mxu0 0.0
      %620 = vmatpush1.xpose.msra.mxu0 0.0
      %621 = vmatprep.subr.mxu0 0.0
      %622 = vmatpush1.xpose.msra.mxu0 0.0
      %623 = vmatprep.subr.mxu0 0.0
      %624 = vmatpush1.xpose.msra.mxu0 0.0
      %625 = vmatprep.subr.mxu0 0.0
      %626 = vmatpush1.xpose.msra.mxu0 0.0
      %627 = vmatprep.subr.mxu0 0.0
      %628 = vmatpush1.xpose.msra.mxu0 0.0
      %629 = vmatprep.subr.mxu0 0.0
      %630 = vmatpush1.xpose.msra.mxu0 0.0
      %631 = vmatprep.subr.mxu0 0.0
      %632 = vmatpush1.xpose.msra.mxu0 0.0
      %633 = vmatprep.subr.mxu0 0.0
      %634 = vmatpush1.xpose.msra.mxu0 0.0
      %635 = vmatprep.subr.mxu0 0.0
      %636 = vmatpush1.xpose.msra.mxu0 0.0
      %637 = vmatprep.subr.mxu0 0.0
      %638 = vmatpush1.xpose.msra.mxu0 0.0
      %639 = vmatprep.subr.mxu0 0.0
      %640 = vmatpush1.xpose.msra.mxu0 0.0
      %641 = vmatprep.subr.mxu0 0.0
      %642 = vmatpush1.xpose.msra.mxu0 0.0
      %643 = vmatprep.subr.mxu0 0.0
      %644 = vmatpush1.xpose.msra.mxu0 0.0
      %645 = vmatprep.subr.mxu0 0.0
      %646 = vmatpush1.xpose.msra.mxu0 0.0
      %647 = vmatprep.subr.mxu0 0.0
      %648 = vmatpush1.xpose.msra.mxu0 0.0
      %649 = vmatprep.subr.mxu0 0.0
      %650 = vmatpush1.xpose.msra.mxu0 0.0
      %651 = vmatprep.subr.mxu0 0.0
      %652 = vmatpush1.xpose.msra.mxu0 0.0
      %653 = vmatprep.subr.mxu0 0.0
      %654 = vmatpush1.xpose.msra.mxu0 0.0
      %655 = vmatprep.subr.mxu0 0.0
      %656 = vmatpush1.xpose.msra.mxu0 0.0
      %657 = vmatprep.subr.mxu0 0.0
      %658 = vmatpush1.xpose.msra.mxu0 0.0
      %659 = vmatprep.subr.mxu0 0.0
      %660 = vmatpush1.xpose.msra.mxu0 0.0
      %661 = vmatprep.subr.mxu0 0.0
      %662 = vmatpush1.xpose.msra.mxu0 0.0
      %663 = vmatprep.subr.mxu0 0.0
      %664 = vmatpush1.xpose.msra.mxu0 0.0
      %665 = vmatprep.subr.mxu0 0.0
      %666 = vmatpush1.xpose.msra.mxu0 0.0
      %667 = vmatprep.subr.mxu0 0.0
      %668 = vmatpush1.xpose.msra.mxu0 0.0
      %669 = vmatprep.subr.mxu0 0.0
      %670 = vmatpush1.xpose.msra.mxu0 0.0
      %671 = vmatprep.subr.mxu0 0.0
      %672 = vmatpush1.xpose.msra.mxu0 0.0
      %673 = vmatprep.subr.mxu0 0.0
      %674 = vmatpush1.xpose.msra.mxu0 0.0
      %675 = vmatprep.mubr.f32.mxu0 0.0
      %676 = vmatmul.mubr.f32.gmra.mrb[0].mxu0 %v607
      %v677 = vpop.f32.mrb[0].mxu0
      %v678 = vadd.f32 0.0, %v677
      %v679 = vpop.f32.mrb[0].mxu0
      %680 = vdwg.mxu0
      %682 = vrot.lane.b32.xlu0 %v460, 120
      %v683 = vpop.permute.xlu0 %682
      %v684 = vsel %vm606, %v460, 0
      %v686 = vsel %vm606, %v683, 0
      %688 = vmatprep.subr.mxu0 0.0
      %689 = vmatpush1.xpose.msra.mxu0 %v686
      %690 = vmatprep.subr.mxu0 0.0
      %691 = vmatpush1.xpose.msra.mxu0 0.0
      %692 = vmatprep.subr.mxu0 0.0
      %693 = vmatpush1.xpose.msra.mxu0 0.0
      %694 = vmatprep.subr.mxu0 0.0
      %695 = vmatpush1.xpose.msra.mxu0 0.0
      %696 = vmatprep.subr.mxu0 0.0
      %697 = vmatpush1.xpose.msra.mxu0 0.0
      %698 = vmatprep.subr.mxu0 0.0
      %699 = vmatpush1.xpose.msra.mxu0 0.0
      %700 = vmatprep.subr.mxu0 0.0
      %701 = vmatpush1.xpose.msra.mxu0 0.0
      %702 = vmatprep.subr.mxu0 0.0
      %703 = vmatpush1.xpose.msra.mxu0 0.0
      %704 = vmatprep.subr.mxu0 0.0
      %705 = vmatpush1.xpose.msra.mxu0 0.0
      %706 = vmatprep.subr.mxu0 0.0
      %707 = vmatpush1.xpose.msra.mxu0 0.0
      %708 = vmatprep.subr.mxu0 0.0
      %709 = vmatpush1.xpose.msra.mxu0 0.0
      %710 = vmatprep.subr.mxu0 0.0
      %711 = vmatpush1.xpose.msra.mxu0 0.0
      %712 = vmatprep.subr.mxu0 0.0
      %713 = vmatpush1.xpose.msra.mxu0 0.0
      %714 = vmatprep.subr.mxu0 0.0
      %715 = vmatpush1.xpose.msra.mxu0 0.0
      %716 = vmatprep.subr.mxu0 0.0
      %717 = vmatpush1.xpose.msra.mxu0 0.0
      %718 = vmatprep.subr.mxu0 0.0
      %719 = vmatpush1.xpose.msra.mxu0 0.0
      %720 = vmatprep.subr.mxu0 0.0
      %721 = vmatpush1.xpose.msra.mxu0 0.0
      %722 = vmatprep.subr.mxu0 0.0
      %723 = vmatpush1.xpose.msra.mxu0 0.0
      %724 = vmatprep.subr.mxu0 0.0
      %725 = vmatpush1.xpose.msra.mxu0 0.0
      %726 = vmatprep.subr.mxu0 0.0
      %727 = vmatpush1.xpose.msra.mxu0 0.0
      %728 = vmatprep.subr.mxu0 0.0
      %729 = vmatpush1.xpose.msra.mxu0 0.0
      %730 = vmatprep.subr.mxu0 0.0
      %731 = vmatpush1.xpose.msra.mxu0 0.0
      %732 = vmatprep.subr.mxu0 0.0
      %733 = vmatpush1.xpose.msra.mxu0 0.0
      %734 = vmatprep.subr.mxu0 0.0
      %735 = vmatpush1.xpose.msra.mxu0 0.0
      %736 = vmatprep.subr.mxu0 0.0
      %737 = vmatpush1.xpose.msra.mxu0 0.0
      %738 = vmatprep.subr.mxu0 0.0
      %739 = vmatpush1.xpose.msra.mxu0 0.0
      %740 = vmatprep.subr.mxu0 0.0
      %741 = vmatpush1.xpose.msra.mxu0 0.0
      %742 = vmatprep.subr.mxu0 0.0
      %743 = vmatpush1.xpose.msra.mxu0 0.0
      %744 = vmatprep.subr.mxu0 0.0
      %745 = vmatpush1.xpose.msra.mxu0 0.0
      %746 = vmatprep.subr.mxu0 0.0
      %747 = vmatpush1.xpose.msra.mxu0 0.0
      %748 = vmatprep.subr.mxu0 0.0
      %749 = vmatpush1.xpose.msra.mxu0 0.0
      %750 = vmatprep.subr.mxu0 0.0
      %751 = vmatpush1.xpose.msra.mxu0 0.0
      %752 = vmatprep.mubr.f32.mxu0 0.0
      %753 = vmatmul.mubr.f32.gmra.mrb[0].mxu0 %v684
      %v754 = vpop.f32.mrb[0].mxu0
      %v755 = vadd.f32 0.0, %v754
      %v756 = vpop.f32.mrb[0].mxu0
      %757 = vdwg.mxu0
      %759 = vrot.lane.b32.xlu0 %v530, 120
      %v760 = vpop.permute.xlu0 %759
      %v761 = vsel %vm606, %v530, 0
      %v763 = vsel %vm606, %v760, 0
      %765 = vmatprep.subr.mxu0 0.0
      %766 = vmatpush1.xpose.msra.mxu0 %v763
      %767 = vmatprep.subr.mxu0 0.0
      %768 = vmatpush1.xpose.msra.mxu0 0.0
      %769 = vmatprep.subr.mxu0 0.0
      %770 = vmatpush1.xpose.msra.mxu0 0.0
      %771 = vmatprep.subr.mxu0 0.0
      %772 = vmatpush1.xpose.msra.mxu0 0.0
      %773 = vmatprep.subr.mxu0 0.0
      %774 = vmatpush1.xpose.msra.mxu0 0.0
      %775 = vmatprep.subr.mxu0 0.0
      %776 = vmatpush1.xpose.msra.mxu0 0.0
      %777 = vmatprep.subr.mxu0 0.0
      %778 = vmatpush1.xpose.msra.mxu0 0.0
      %779 = vmatprep.subr.mxu0 0.0
      %780 = vmatpush1.xpose.msra.mxu0 0.0
      %781 = vmatprep.subr.mxu0 0.0
      %782 = vmatpush1.xpose.msra.mxu0 0.0
      %783 = vmatprep.subr.mxu0 0.0
      %784 = vmatpush1.xpose.msra.mxu0 0.0
      %785 = vmatprep.subr.mxu0 0.0
      %786 = vmatpush1.xpose.msra.mxu0 0.0
      %787 = vmatprep.subr.mxu0 0.0
      %788 = vmatpush1.xpose.msra.mxu0 0.0
      %789 = vmatprep.subr.mxu0 0.0
      %790 = vmatpush1.xpose.msra.mxu0 0.0
      %791 = vmatprep.subr.mxu0 0.0
      %792 = vmatpush1.xpose.msra.mxu0 0.0
      %793 = vmatprep.subr.mxu0 0.0
      %794 = vmatpush1.xpose.msra.mxu0 0.0
      %795 = vmatprep.subr.mxu0 0.0
      %796 = vmatpush1.xpose.msra.mxu0 0.0
      %797 = vmatprep.subr.mxu0 0.0
      %798 = vmatpush1.xpose.msra.mxu0 0.0
      %799 = vmatprep.subr.mxu0 0.0
      %800 = vmatpush1.xpose.msra.mxu0 0.0
      %801 = vmatprep.subr.mxu0 0.0
      %802 = vmatpush1.xpose.msra.mxu0 0.0
      %803 = vmatprep.subr.mxu0 0.0
      %804 = vmatpush1.xpose.msra.mxu0 0.0
      %805 = vmatprep.subr.mxu0 0.0
      %806 = vmatpush1.xpose.msra.mxu0 0.0
      %807 = vmatprep.subr.mxu0 0.0
      %808 = vmatpush1.xpose.msra.mxu0 0.0
      %809 = vmatprep.subr.mxu0 0.0
      %810 = vmatpush1.xpose.msra.mxu0 0.0
      %811 = vmatprep.subr.mxu0 0.0
      %812 = vmatpush1.xpose.msra.mxu0 0.0
      %813 = vmatprep.subr.mxu0 0.0
      %814 = vmatpush1.xpose.msra.mxu0 0.0
      %815 = vmatprep.subr.mxu0 0.0
      %816 = vmatpush1.xpose.msra.mxu0 0.0
      %817 = vmatprep.subr.mxu0 0.0
      %818 = vmatpush1.xpose.msra.mxu0 0.0
      %819 = vmatprep.subr.mxu0 0.0
      %820 = vmatpush1.xpose.msra.mxu0 0.0
      %821 = vmatprep.subr.mxu0 0.0
      %822 = vmatpush1.xpose.msra.mxu0 0.0
      %823 = vmatprep.subr.mxu0 0.0
      %824 = vmatpush1.xpose.msra.mxu0 0.0
      %825 = vmatprep.subr.mxu0 0.0
      %826 = vmatpush1.xpose.msra.mxu0 0.0
      %827 = vmatprep.subr.mxu0 0.0
      %828 = vmatpush1.xpose.msra.mxu0 0.0
      %829 = vmatprep.mubr.f32.mxu0 0.0
      %830 = vmatmul.mubr.f32.gmra.mrb[0].mxu0 %v761
      %v831 = vpop.f32.mrb[0].mxu0
      %v832 = vadd.f32 0.0, %v831
      %v833 = vpop.f32.mrb[0].mxu0
      %834 = vdwg.mxu0
      %836 = vrot.lane.b32.xlu0 %v600, 120
      %v837 = vpop.permute.xlu0 %836
      %v838 = vsel %vm606, %v600, 0
      %v840 = vsel %vm606, %v837, 0
      %842 = vmatprep.subr.mxu0 0.0
      %843 = vmatpush1.xpose.msra.mxu0 %v840
      %844 = vmatprep.subr.mxu0 0.0
      %845 = vmatpush1.xpose.msra.mxu0 0.0
      %846 = vmatprep.subr.mxu0 0.0
      %847 = vmatpush1.xpose.msra.mxu0 0.0
      %848 = vmatprep.subr.mxu0 0.0
      %849 = vmatpush1.xpose.msra.mxu0 0.0
      %850 = vmatprep.subr.mxu0 0.0
      %851 = vmatpush1.xpose.msra.mxu0 0.0
      %852 = vmatprep.subr.mxu0 0.0
      %853 = vmatpush1.xpose.msra.mxu0 0.0
      %854 = vmatprep.subr.mxu0 0.0
      %855 = vmatpush1.xpose.msra.mxu0 0.0
      %856 = vmatprep.subr.mxu0 0.0
      %857 = vmatpush1.xpose.msra.mxu0 0.0
      %858 = vmatprep.subr.mxu0 0.0
      %859 = vmatpush1.xpose.msra.mxu0 0.0
      %860 = vmatprep.subr.mxu0 0.0
      %861 = vmatpush1.xpose.msra.mxu0 0.0
      %862 = vmatprep.subr.mxu0 0.0
      %863 = vmatpush1.xpose.msra.mxu0 0.0
      %864 = vmatprep.subr.mxu0 0.0
      %865 = vmatpush1.xpose.msra.mxu0 0.0
      %866 = vmatprep.subr.mxu0 0.0
      %867 = vmatpush1.xpose.msra.mxu0 0.0
      %868 = vmatprep.subr.mxu0 0.0
      %869 = vmatpush1.xpose.msra.mxu0 0.0
      %870 = vmatprep.subr.mxu0 0.0
      %871 = vmatpush1.xpose.msra.mxu0 0.0
      %872 = vmatprep.subr.mxu0 0.0
      %873 = vmatpush1.xpose.msra.mxu0 0.0
      %874 = vmatprep.subr.mxu0 0.0
      %875 = vmatpush1.xpose.msra.mxu0 0.0
      %876 = vmatprep.subr.mxu0 0.0
      %877 = vmatpush1.xpose.msra.mxu0 0.0
      %878 = vmatprep.subr.mxu0 0.0
      %879 = vmatpush1.xpose.msra.mxu0 0.0
      %880 = vmatprep.subr.mxu0 0.0
      %881 = vmatpush1.xpose.msra.mxu0 0.0
      %882 = vmatprep.subr.mxu0 0.0
      %883 = vmatpush1.xpose.msra.mxu0 0.0
      %884 = vmatprep.subr.mxu0 0.0
      %885 = vmatpush1.xpose.msra.mxu0 0.0
      %886 = vmatprep.subr.mxu0 0.0
      %887 = vmatpush1.xpose.msra.mxu0 0.0
      %888 = vmatprep.subr.mxu0 0.0
      %889 = vmatpush1.xpose.msra.mxu0 0.0
      %890 = vmatprep.subr.mxu0 0.0
      %891 = vmatpush1.xpose.msra.mxu0 0.0
      %892 = vmatprep.subr.mxu0 0.0
      %893 = vmatpush1.xpose.msra.mxu0 0.0
      %894 = vmatprep.subr.mxu0 0.0
      %895 = vmatpush1.xpose.msra.mxu0 0.0
      %896 = vmatprep.subr.mxu0 0.0
      %897 = vmatpush1.xpose.msra.mxu0 0.0
      %898 = vmatprep.subr.mxu0 0.0
      %899 = vmatpush1.xpose.msra.mxu0 0.0
      %900 = vmatprep.subr.mxu0 0.0
      %901 = vmatpush1.xpose.msra.mxu0 0.0
      %902 = vmatprep.subr.mxu0 0.0
      %903 = vmatpush1.xpose.msra.mxu0 0.0
      %904 = vmatprep.subr.mxu0 0.0
      %905 = vmatpush1.xpose.msra.mxu0 0.0
      %906 = vmatprep.mubr.f32.mxu0 0.0
      %907 = vmatmul.mubr.f32.gmra.mrb[0].mxu0 %v838
      %v908 = vpop.f32.mrb[0].mxu0
      %v909 = vadd.f32 0.0, %v908
      %v910 = vpop.f32.mrb[0].mxu0
      %911 = vdwg.mxu0
      %v912 = vsel %vm606, %v678, -inf
      %913 = vmax.xlane.f32.xlu0 %v912
      %v914 = vpop.xlane.xlu0 %913
      %v915 = vsel %vm606, %v755, -inf
      %916 = vmax.xlane.f32.xlu0 %v915
      %v917 = vpop.xlane.xlu0 %916
      %v918 = vsel %vm606, %v832, -inf
      %919 = vmax.xlane.f32.xlu0 %v918
      %v920 = vpop.xlane.xlu0 %919
      %v921 = vsel %vm606, %v909, -inf
      %922 = vmax.xlane.f32.xlu0 %v921
      %v923 = vpop.xlane.xlu0 %922
      %v924 = vsub.f32 %v678, %v914
      %v925 = vsub.f32 %v755, %v917
      %v926 = vsub.f32 %v832, %v920
      %v927 = vsub.f32 %v909, %v923
      %v928 = vmul.f32 %v924, 1.442695
      %v929 = vpow.pop %v928
      %v930 = vmul.f32 %v925, 1.442695
      %v931 = vpow.pop %v930
      %v932 = vmul.f32 %v926, 1.442695
      %v933 = vpow.pop %v932
      %v934 = vmul.f32 %v927, 1.442695
      %v935 = vpow.pop %v934
      %v936 = vsel %vm606, %v929, 0.0
      %937 = vadd.xlane.f32.xlu0 %v936
      %v938 = vpop.xlane.xlu0 %937
      %v939 = vsel %vm606, %v931, 0.0
      %940 = vadd.xlane.f32.xlu0 %v939
      %v941 = vpop.xlane.xlu0 %940
      %v942 = vsel %vm606, %v933, 0.0
      %943 = vadd.xlane.f32.xlu0 %v942
      %v944 = vpop.xlane.xlu0 %943
      %v945 = vsel %vm606, %v935, 0.0
      %946 = vadd.xlane.f32.xlu0 %v945
      %v947 = vpop.xlane.xlu0 %946
      %v948 = vrcp.pop %v938
      %v949 = vrcp.pop %v941
      %v950 = vrcp.pop %v944
      %v951 = vrcp.pop %v947
      %v952 = vmul.f32 %v938, %v948
      %v953 = vmul.f32 %v941, %v949
      %v954 = vmul.f32 %v944, %v950
      %v955 = vmul.f32 %v947, %v951
      %v956 = vsub.f32 2.0, %v952
      %v957 = vsub.f32 2.0, %v953
      %v958 = vsub.f32 2.0, %v954
      %v959 = vsub.f32 2.0, %v955
      %v960 = vmul.f32 %v948, %v956
      %v961 = vmul.f32 %v949, %v957
      %v962 = vmul.f32 %v950, %v958
      %v963 = vmul.f32 %v951, %v959
      %v964 = vmul.f32 %v929, %v960
      %v965 = vmul.f32 %v931, %v961
      %v966 = vmul.f32 %v933, %v962
      %v967 = vmul.f32 %v935, %v963
      %968 = vrot.lane.b32.xlu0 %v390, 112
      %v969 = vpop.permute.xlu0 %968
      %v972 = vsel %vm606, %v964, 0
      %974 = vmatprep.subr.mxu0 0.0
      %975 = vmatpush1.msra.mxu0 %v969
      %976 = vmatprep.subr.mxu0 0.0
      %977 = vmatpush1.msra.mxu0 0.0
      %978 = vmatprep.subr.mxu0 0.0
      %979 = vmatpush1.msra.mxu0 0.0
      %980 = vmatprep.subr.mxu0 0.0
      %981 = vmatpush1.msra.mxu0 0.0
      %982 = vmatprep.subr.mxu0 0.0
      %983 = vmatpush1.msra.mxu0 0.0
      %984 = vmatprep.subr.mxu0 0.0
      %985 = vmatpush1.msra.mxu0 0.0
      %986 = vmatprep.subr.mxu0 0.0
      %987 = vmatpush1.msra.mxu0 0.0
      %988 = vmatprep.subr.mxu0 0.0
      %989 = vmatpush1.msra.mxu0 0.0
      %990 = vmatprep.subr.mxu0 0.0
      %991 = vmatpush1.msra.mxu0 0.0
      %992 = vmatprep.subr.mxu0 0.0
      %993 = vmatpush1.msra.mxu0 0.0
      %994 = vmatprep.subr.mxu0 0.0
      %995 = vmatpush1.msra.mxu0 0.0
      %996 = vmatprep.subr.mxu0 0.0
      %997 = vmatpush1.msra.mxu0 0.0
      %998 = vmatprep.subr.mxu0 0.0
      %999 = vmatpush1.msra.mxu0 0.0
      %1000 = vmatprep.subr.mxu0 0.0
      %1001 = vmatpush1.msra.mxu0 0.0
      %1002 = vmatprep.subr.mxu0 0.0
      %1003 = vmatpush1.msra.mxu0 0.0
      %1004 = vmatprep.subr.mxu0 0.0
      %1005 = vmatpush1.msra.mxu0 0.0
      %1006 = vmatprep.subr.mxu0 0.0
      %1007 = vmatpush1.msra.mxu0 0.0
      %1008 = vmatprep.subr.mxu0 0.0
      %1009 = vmatpush1.msra.mxu0 0.0
      %1010 = vmatprep.subr.mxu0 0.0
      %1011 = vmatpush1.msra.mxu0 0.0
      %1012 = vmatprep.subr.mxu0 0.0
      %1013 = vmatpush1.msra.mxu0 0.0
      %1014 = vmatprep.subr.mxu0 0.0
      %1015 = vmatpush1.msra.mxu0 0.0
      %1016 = vmatprep.subr.mxu0 0.0
      %1017 = vmatpush1.msra.mxu0 0.0
      %1018 = vmatprep.subr.mxu0 0.0
      %1019 = vmatpush1.msra.mxu0 0.0
      %1020 = vmatprep.subr.mxu0 0.0
      %1021 = vmatpush1.msra.mxu0 0.0
      %1022 = vmatprep.subr.mxu0 0.0
      %1023 = vmatpush1.msra.mxu0 0.0
      %1024 = vmatprep.subr.mxu0 0.0
      %1025 = vmatpush1.msra.mxu0 0.0
      %1026 = vmatprep.subr.mxu0 0.0
      %1027 = vmatpush1.msra.mxu0 0.0
      %1028 = vmatprep.subr.mxu0 0.0
      %1029 = vmatpush1.msra.mxu0 0.0
      %1030 = vmatprep.subr.mxu0 0.0
      %1031 = vmatpush1.msra.mxu0 0.0
      %1032 = vmatprep.subr.mxu0 0.0
      %1033 = vmatpush1.msra.mxu0 0.0
      %1034 = vmatprep.subr.mxu0 0.0
      %1035 = vmatpush1.msra.mxu0 0.0
      %1036 = vmatprep.subr.mxu0 0.0
      %1037 = vmatpush1.msra.mxu0 0.0
      %1038 = vmatprep.mubr.f32.mxu0 0.0
      %1039 = vmatmul.mubr.f32.gmra.mrb[0].mxu0 %v972
      %v1040 = vpop.f32.mrb[0].mxu0
      %v1041 = vadd.f32 0.0, %v1040
      %v1042 = vpop.f32.mrb[0].mxu0
      %1043 = vdwg.mxu0
      %1044 = vrot.lane.b32.xlu0 %v460, 112
      %v1045 = vpop.permute.xlu0 %1044
      %v1048 = vsel %vm606, %v965, 0
      %1050 = vmatprep.subr.mxu0 0.0
      %1051 = vmatpush1.msra.mxu0 %v1045
      %1052 = vmatprep.subr.mxu0 0.0
      %1053 = vmatpush1.msra.mxu0 0.0
      %1054 = vmatprep.subr.mxu0 0.0
      %1055 = vmatpush1.msra.mxu0 0.0
      %1056 = vmatprep.subr.mxu0 0.0
      %1057 = vmatpush1.msra.mxu0 0.0
      %1058 = vmatprep.subr.mxu0 0.0
      %1059 = vmatpush1.msra.mxu0 0.0
      %1060 = vmatprep.subr.mxu0 0.0
      %1061 = vmatpush1.msra.mxu0 0.0
      %1062 = vmatprep.subr.mxu0 0.0
      %1063 = vmatpush1.msra.mxu0 0.0
      %1064 = vmatprep.subr.mxu0 0.0
      %1065 = vmatpush1.msra.mxu0 0.0
      %1066 = vmatprep.subr.mxu0 0.0
      %1067 = vmatpush1.msra.mxu0 0.0
      %1068 = vmatprep.subr.mxu0 0.0
      %1069 = vmatpush1.msra.mxu0 0.0
      %1070 = vmatprep.subr.mxu0 0.0
      %1071 = vmatpush1.msra.mxu0 0.0
      %1072 = vmatprep.subr.mxu0 0.0
      %1073 = vmatpush1.msra.mxu0 0.0
      %1074 = vmatprep.subr.mxu0 0.0
      %1075 = vmatpush1.msra.mxu0 0.0
      %1076 = vmatprep.subr.mxu0 0.0
      %1077 = vmatpush1.msra.mxu0 0.0
      %1078 = vmatprep.subr.mxu0 0.0
      %1079 = vmatpush1.msra.mxu0 0.0
      %1080 = vmatprep.subr.mxu0 0.0
      %1081 = vmatpush1.msra.mxu0 0.0
      %1082 = vmatprep.subr.mxu0 0.0
      %1083 = vmatpush1.msra.mxu0 0.0
      %1084 = vmatprep.subr.mxu0 0.0
      %1085 = vmatpush1.msra.mxu0 0.0
      %1086 = vmatprep.subr.mxu0 0.0
      %1087 = vmatpush1.msra.mxu0 0.0
      %1088 = vmatprep.subr.mxu0 0.0
      %1089 = vmatpush1.msra.mxu0 0.0
      %1090 = vmatprep.subr.mxu0 0.0
      %1091 = vmatpush1.msra.mxu0 0.0
      %1092 = vmatprep.subr.mxu0 0.0
      %1093 = vmatpush1.msra.mxu0 0.0
      %1094 = vmatprep.subr.mxu0 0.0
      %1095 = vmatpush1.msra.mxu0 0.0
      %1096 = vmatprep.subr.mxu0 0.0
      %1097 = vmatpush1.msra.mxu0 0.0
      %1098 = vmatprep.subr.mxu0 0.0
      %1099 = vmatpush1.msra.mxu0 0.0
      %1100 = vmatprep.subr.mxu0 0.0
      %1101 = vmatpush1.msra.mxu0 0.0
      %1102 = vmatprep.subr.mxu0 0.0
      %1103 = vmatpush1.msra.mxu0 0.0
      %1104 = vmatprep.subr.mxu0 0.0
      %1105 = vmatpush1.msra.mxu0 0.0
      %1106 = vmatprep.subr.mxu0 0.0
      %1107 = vmatpush1.msra.mxu0 0.0
      %1108 = vmatprep.subr.mxu0 0.0
      %1109 = vmatpush1.msra.mxu0 0.0
      %1110 = vmatprep.subr.mxu0 0.0
      %1111 = vmatpush1.msra.mxu0 0.0
      %1112 = vmatprep.subr.mxu0 0.0
      %1113 = vmatpush1.msra.mxu0 0.0
      %1114 = vmatprep.mubr.f32.mxu0 0.0
      %1115 = vmatmul.mubr.f32.gmra.mrb[0].mxu0 %v1048
      %v1116 = vpop.f32.mrb[0].mxu0
      %v1117 = vadd.f32 0.0, %v1116
      %v1118 = vpop.f32.mrb[0].mxu0
      %1119 = vdwg.mxu0
      %1120 = vrot.lane.b32.xlu0 %v530, 112
      %v1121 = vpop.permute.xlu0 %1120
      %v1124 = vsel %vm606, %v966, 0
      %1126 = vmatprep.subr.mxu0 0.0
      %1127 = vmatpush1.msra.mxu0 %v1121
      %1128 = vmatprep.subr.mxu0 0.0
      %1129 = vmatpush1.msra.mxu0 0.0
      %1130 = vmatprep.subr.mxu0 0.0
      %1131 = vmatpush1.msra.mxu0 0.0
      %1132 = vmatprep.subr.mxu0 0.0
      %1133 = vmatpush1.msra.mxu0 0.0
      %1134 = vmatprep.subr.mxu0 0.0
      %1135 = vmatpush1.msra.mxu0 0.0
      %1136 = vmatprep.subr.mxu0 0.0
      %1137 = vmatpush1.msra.mxu0 0.0
      %1138 = vmatprep.subr.mxu0 0.0
      %1139 = vmatpush1.msra.mxu0 0.0
      %1140 = vmatprep.subr.mxu0 0.0
      %1141 = vmatpush1.msra.mxu0 0.0
      %1142 = vmatprep.subr.mxu0 0.0
      %1143 = vmatpush1.msra.mxu0 0.0
      %1144 = vmatprep.subr.mxu0 0.0
      %1145 = vmatpush1.msra.mxu0 0.0
      %1146 = vmatprep.subr.mxu0 0.0
      %1147 = vmatpush1.msra.mxu0 0.0
      %1148 = vmatprep.subr.mxu0 0.0
      %1149 = vmatpush1.msra.mxu0 0.0
      %1150 = vmatprep.subr.mxu0 0.0
      %1151 = vmatpush1.msra.mxu0 0.0
      %1152 = vmatprep.subr.mxu0 0.0
      %1153 = vmatpush1.msra.mxu0 0.0
      %1154 = vmatprep.subr.mxu0 0.0
      %1155 = vmatpush1.msra.mxu0 0.0
      %1156 = vmatprep.subr.mxu0 0.0
      %1157 = vmatpush1.msra.mxu0 0.0
      %1158 = vmatprep.subr.mxu0 0.0
      %1159 = vmatpush1.msra.mxu0 0.0
      %1160 = vmatprep.subr.mxu0 0.0
      %1161 = vmatpush1.msra.mxu0 0.0
      %1162 = vmatprep.subr.mxu0 0.0
      %1163 = vmatpush1.msra.mxu0 0.0
      %1164 = vmatprep.subr.mxu0 0.0
      %1165 = vmatpush1.msra.mxu0 0.0
      %1166 = vmatprep.subr.mxu0 0.0
      %1167 = vmatpush1.msra.mxu0 0.0
      %1168 = vmatprep.subr.mxu0 0.0
      %1169 = vmatpush1.msra.mxu0 0.0
      %1170 = vmatprep.subr.mxu0 0.0
      %1171 = vmatpush1.msra.mxu0 0.0
      %1172 = vmatprep.subr.mxu0 0.0
      %1173 = vmatpush1.msra.mxu0 0.0
      %1174 = vmatprep.subr.mxu0 0.0
      %1175 = vmatpush1.msra.mxu0 0.0
      %1176 = vmatprep.subr.mxu0 0.0
      %1177 = vmatpush1.msra.mxu0 0.0
      %1178 = vmatprep.subr.mxu0 0.0
      %1179 = vmatpush1.msra.mxu0 0.0
      %1180 = vmatprep.subr.mxu0 0.0
      %1181 = vmatpush1.msra.mxu0 0.0
      %1182 = vmatprep.subr.mxu0 0.0
      %1183 = vmatpush1.msra.mxu0 0.0
      %1184 = vmatprep.subr.mxu0 0.0
      %1185 = vmatpush1.msra.mxu0 0.0
      %1186 = vmatprep.subr.mxu0 0.0
      %1187 = vmatpush1.msra.mxu0 0.0
      %1188 = vmatprep.subr.mxu0 0.0
      %1189 = vmatpush1.msra.mxu0 0.0
      %1190 = vmatprep.mubr.f32.mxu0 0.0
      %1191 = vmatmul.mubr.f32.gmra.mrb[0].mxu0 %v1124
      %v1192 = vpop.f32.mrb[0].mxu0
      %v1193 = vadd.f32 0.0, %v1192
      %v1194 = vpop.f32.mrb[0].mxu0
      %1195 = vdwg.mxu0
      %1196 = vrot.lane.b32.xlu0 %v600, 112
      %v1197 = vpop.permute.xlu0 %1196
      %v1200 = vsel %vm606, %v967, 0
      %1202 = vmatprep.subr.mxu0 0.0
      %1203 = vmatpush1.msra.mxu0 %v1197
      %1204 = vmatprep.subr.mxu0 0.0
      %1205 = vmatpush1.msra.mxu0 0.0
      %1206 = vmatprep.subr.mxu0 0.0
      %1207 = vmatpush1.msra.mxu0 0.0
      %1208 = vmatprep.subr.mxu0 0.0
      %1209 = vmatpush1.msra.mxu0 0.0
      %1210 = vmatprep.subr.mxu0 0.0
      %1211 = vmatpush1.msra.mxu0 0.0
      %1212 = vmatprep.subr.mxu0 0.0
      %1213 = vmatpush1.msra.mxu0 0.0
      %1214 = vmatprep.subr.mxu0 0.0
      %1215 = vmatpush1.msra.mxu0 0.0
      %1216 = vmatprep.subr.mxu0 0.0
      %1217 = vmatpush1.msra.mxu0 0.0
      %1218 = vmatprep.subr.mxu0 0.0
      %1219 = vmatpush1.msra.mxu0 0.0
      %1220 = vmatprep.subr.mxu0 0.0
      %1221 = vmatpush1.msra.mxu0 0.0
      %1222 = vmatprep.subr.mxu0 0.0
      %1223 = vmatpush1.msra.mxu0 0.0
      %1224 = vmatprep.subr.mxu0 0.0
      %1225 = vmatpush1.msra.mxu0 0.0
      %1226 = vmatprep.subr.mxu0 0.0
      %1227 = vmatpush1.msra.mxu0 0.0
      %1228 = vmatprep.subr.mxu0 0.0
      %1229 = vmatpush1.msra.mxu0 0.0
      %1230 = vmatprep.subr.mxu0 0.0
      %1231 = vmatpush1.msra.mxu0 0.0
      %1232 = vmatprep.subr.mxu0 0.0
      %1233 = vmatpush1.msra.mxu0 0.0
      %1234 = vmatprep.subr.mxu0 0.0
      %1235 = vmatpush1.msra.mxu0 0.0
      %1236 = vmatprep.subr.mxu0 0.0
      %1237 = vmatpush1.msra.mxu0 0.0
      %1238 = vmatprep.subr.mxu0 0.0
      %1239 = vmatpush1.msra.mxu0 0.0
      %1240 = vmatprep.subr.mxu0 0.0
      %1241 = vmatpush1.msra.mxu0 0.0
      %1242 = vmatprep.subr.mxu0 0.0
      %1243 = vmatpush1.msra.mxu0 0.0
      %1244 = vmatprep.subr.mxu0 0.0
      %1245 = vmatpush1.msra.mxu0 0.0
      %1246 = vmatprep.subr.mxu0 0.0
      %1247 = vmatpush1.msra.mxu0 0.0
      %1248 = vmatprep.subr.mxu0 0.0
      %1249 = vmatpush1.msra.mxu0 0.0
      %1250 = vmatprep.subr.mxu0 0.0
      %1251 = vmatpush1.msra.mxu0 0.0
      %1252 = vmatprep.subr.mxu0 0.0
      %1253 = vmatpush1.msra.mxu0 0.0
      %1254 = vmatprep.subr.mxu0 0.0
      %1255 = vmatpush1.msra.mxu0 0.0
      %1256 = vmatprep.subr.mxu0 0.0
      %1257 = vmatpush1.msra.mxu0 0.0
      %1258 = vmatprep.subr.mxu0 0.0
      %1259 = vmatpush1.msra.mxu0 0.0
      %1260 = vmatprep.subr.mxu0 0.0
      %1261 = vmatpush1.msra.mxu0 0.0
      %1262 = vmatprep.subr.mxu0 0.0
      %1263 = vmatpush1.msra.mxu0 0.0
      %1264 = vmatprep.subr.mxu0 0.0
      %1265 = vmatpush1.msra.mxu0 0.0
      %1266 = vmatprep.mubr.f32.mxu0 0.0
      %1267 = vmatmul.mubr.f32.gmra.mrb[0].mxu0 %v1200
      %v1268 = vpop.f32.mrb[0].mxu0
      %v1269 = vadd.f32 0.0, %v1268
      %v1270 = vpop.f32.mrb[0].mxu0
      %1271 = vdwg.mxu0
      %v1272 = vld [vmem:[%s3] sm:$0xff]
      %v1273 = vld [vmem:[%s3 + $0x8] sm:$0xff]
      %v1274 = vld [vmem:[%s3 + $0x10] sm:$0xff]
      %v1275 = vld [vmem:[%s3 + $0x18] sm:$0xff]
      %v1277 = vsel %vm606, %v1041, 0
      %1279 = vmatprep.subr.mxu0 0.0
      %1280 = vmatpush1.msra.mxu0 %v1272
      %1281 = vmatprep.subr.mxu0 0.0
      %1282 = vmatpush1.msra.mxu0 0.0
      %1283 = vmatprep.subr.mxu0 0.0
      %1284 = vmatpush1.msra.mxu0 0.0
      %1285 = vmatprep.subr.mxu0 0.0
      %1286 = vmatpush1.msra.mxu0 0.0
      %1287 = vmatprep.subr.mxu0 0.0
      %1288 = vmatpush1.msra.mxu0 0.0
      %1289 = vmatprep.subr.mxu0 0.0
      %1290 = vmatpush1.msra.mxu0 0.0
      %1291 = vmatprep.subr.mxu0 0.0
      %1292 = vmatpush1.msra.mxu0 0.0
      %1293 = vmatprep.subr.mxu0 0.0
      %1294 = vmatpush1.msra.mxu0 0.0
      %1295 = vmatprep.subr.mxu0 0.0
      %1296 = vmatpush1.msra.mxu0 0.0
      %1297 = vmatprep.subr.mxu0 0.0
      %1298 = vmatpush1.msra.mxu0 0.0
      %1299 = vmatprep.subr.mxu0 0.0
      %1300 = vmatpush1.msra.mxu0 0.0
      %1301 = vmatprep.subr.mxu0 0.0
      %1302 = vmatpush1.msra.mxu0 0.0
      %1303 = vmatprep.subr.mxu0 0.0
      %1304 = vmatpush1.msra.mxu0 0.0
      %1305 = vmatprep.subr.mxu0 0.0
      %1306 = vmatpush1.msra.mxu0 0.0
      %1307 = vmatprep.subr.mxu0 0.0
      %1308 = vmatpush1.msra.mxu0 0.0
      %1309 = vmatprep.subr.mxu0 0.0
      %1310 = vmatpush1.msra.mxu0 0.0
      %1311 = vmatprep.subr.mxu0 0.0
      %1312 = vmatpush1.msra.mxu0 0.0
      %1313 = vmatprep.subr.mxu0 0.0
      %1314 = vmatpush1.msra.mxu0 0.0
      %1315 = vmatprep.subr.mxu0 0.0
      %1316 = vmatpush1.msra.mxu0 0.0
      %1317 = vmatprep.subr.mxu0 0.0
      %1318 = vmatpush1.msra.mxu0 0.0
      %1319 = vmatprep.subr.mxu0 0.0
      %1320 = vmatpush1.msra.mxu0 0.0
      %1321 = vmatprep.subr.mxu0 0.0
      %1322 = vmatpush1.msra.mxu0 0.0
      %1323 = vmatprep.subr.mxu0 0.0
      %1324 = vmatpush1.msra.mxu0 0.0
      %1325 = vmatprep.subr.mxu0 0.0
      %1326 = vmatpush1.msra.mxu0 0.0
      %1327 = vmatprep.subr.mxu0 0.0
      %1328 = vmatpush1.msra.mxu0 0.0
      %1329 = vmatprep.subr.mxu0 0.0
      %1330 = vmatpush1.msra.mxu0 0.0
      %1331 = vmatprep.subr.mxu0 0.0
      %1332 = vmatpush1.msra.mxu0 0.0
      %1333 = vmatprep.subr.mxu0 0.0
      %1334 = vmatpush1.msra.mxu0 0.0
      %1335 = vmatprep.subr.mxu0 0.0
      %1336 = vmatpush1.msra.mxu0 0.0
      %1337 = vmatprep.subr.mxu0 0.0
      %1338 = vmatpush1.msra.mxu0 0.0
      %1339 = vmatprep.subr.mxu0 0.0
      %1340 = vmatpush1.msra.mxu0 0.0
      %1341 = vmatprep.subr.mxu0 0.0
      %1342 = vmatpush1.msra.mxu0 0.0
      %1343 = vmatprep.mubr.f32.mxu0 0.0
      %1344 = vmatmul.mubr.f32.gmra.mrb[0].mxu0 %v1277
      %v1345 = vpop.f32.mrb[0].mxu0
      %v1346 = vadd.f32 0.0, %v1345
      %v1347 = vpop.f32.mrb[0].mxu0
      %1348 = vdwg.mxu0
      %v1350 = vsel %vm606, %v1117, 0
      %1352 = vmatprep.subr.mxu0 0.0
      %1353 = vmatpush1.msra.mxu0 %v1273
      %1354 = vmatprep.subr.mxu0 0.0
      %1355 = vmatpush1.msra.mxu0 0.0
      %1356 = vmatprep.subr.mxu0 0.0
      %1357 = vmatpush1.msra.mxu0 0.0
      %1358 = vmatprep.subr.mxu0 0.0
      %1359 = vmatpush1.msra.mxu0 0.0
      %1360 = vmatprep.subr.mxu0 0.0
      %1361 = vmatpush1.msra.mxu0 0.0
      %1362 = vmatprep.subr.mxu0 0.0
      %1363 = vmatpush1.msra.mxu0 0.0
      %1364 = vmatprep.subr.mxu0 0.0
      %1365 = vmatpush1.msra.mxu0 0.0
      %1366 = vmatprep.subr.mxu0 0.0
      %1367 = vmatpush1.msra.mxu0 0.0
      %1368 = vmatprep.subr.mxu0 0.0
      %1369 = vmatpush1.msra.mxu0 0.0
      %1370 = vmatprep.subr.mxu0 0.0
      %1371 = vmatpush1.msra.mxu0 0.0
      %1372 = vmatprep.subr.mxu0 0.0
      %1373 = vmatpush1.msra.mxu0 0.0
      %1374 = vmatprep.subr.mxu0 0.0
      %1375 = vmatpush1.msra.mxu0 0.0
      %1376 = vmatprep.subr.mxu0 0.0
      %1377 = vmatpush1.msra.mxu0 0.0
      %1378 = vmatprep.subr.mxu0 0.0
      %1379 = vmatpush1.msra.mxu0 0.0
      %1380 = vmatprep.subr.mxu0 0.0
      %1381 = vmatpush1.msra.mxu0 0.0
      %1382 = vmatprep.subr.mxu0 0.0
      %1383 = vmatpush1.msra.mxu0 0.0
      %1384 = vmatprep.subr.mxu0 0.0
      %1385 = vmatpush1.msra.mxu0 0.0
      %1386 = vmatprep.subr.mxu0 0.0
      %1387 = vmatpush1.msra.mxu0 0.0
      %1388 = vmatprep.subr.mxu0 0.0
      %1389 = vmatpush1.msra.mxu0 0.0
      %1390 = vmatprep.subr.mxu0 0.0
      %1391 = vmatpush1.msra.mxu0 0.0
      %1392 = vmatprep.subr.mxu0 0.0
      %1393 = vmatpush1.msra.mxu0 0.0
      %1394 = vmatprep.subr.mxu0 0.0
      %1395 = vmatpush1.msra.mxu0 0.0
      %1396 = vmatprep.subr.mxu0 0.0
      %1397 = vmatpush1.msra.mxu0 0.0
      %1398 = vmatprep.subr.mxu0 0.0
      %1399 = vmatpush1.msra.mxu0 0.0
      %1400 = vmatprep.subr.mxu0 0.0
      %1401 = vmatpush1.msra.mxu0 0.0
      %1402 = vmatprep.subr.mxu0 0.0
      %1403 = vmatpush1.msra.mxu0 0.0
      %1404 = vmatprep.subr.mxu0 0.0
      %1405 = vmatpush1.msra.mxu0 0.0
      %1406 = vmatprep.subr.mxu0 0.0
      %1407 = vmatpush1.msra.mxu0 0.0
      %1408 = vmatprep.subr.mxu0 0.0
      %1409 = vmatpush1.msra.mxu0 0.0
      %1410 = vmatprep.subr.mxu0 0.0
      %1411 = vmatpush1.msra.mxu0 0.0
      %1412 = vmatprep.subr.mxu0 0.0
      %1413 = vmatpush1.msra.mxu0 0.0
      %1414 = vmatprep.subr.mxu0 0.0
      %1415 = vmatpush1.msra.mxu0 0.0
      %1416 = vmatprep.mubr.f32.mxu0 0.0
      %1417 = vmatmul.mubr.f32.gmra.mrb[0].mxu0 %v1350
      %v1418 = vpop.f32.mrb[0].mxu0
      %v1419 = vadd.f32 0.0, %v1418
      %v1420 = vpop.f32.mrb[0].mxu0
      %1421 = vdwg.mxu0
      %v1423 = vsel %vm606, %v1193, 0
      %1425 = vmatprep.subr.mxu0 0.0
      %1426 = vmatpush1.msra.mxu0 %v1274
      %1427 = vmatprep.subr.mxu0 0.0
      %1428 = vmatpush1.msra.mxu0 0.0
      %1429 = vmatprep.subr.mxu0 0.0
      %1430 = vmatpush1.msra.mxu0 0.0
      %1431 = vmatprep.subr.mxu0 0.0
      %1432 = vmatpush1.msra.mxu0 0.0
      %1433 = vmatprep.subr.mxu0 0.0
      %1434 = vmatpush1.msra.mxu0 0.0
      %1435 = vmatprep.subr.mxu0 0.0
      %1436 = vmatpush1.msra.mxu0 0.0
      %1437 = vmatprep.subr.mxu0 0.0
      %1438 = vmatpush1.msra.mxu0 0.0
      %1439 = vmatprep.subr.mxu0 0.0
      %1440 = vmatpush1.msra.mxu0 0.0
      %1441 = vmatprep.subr.mxu0 0.0
      %1442 = vmatpush1.msra.mxu0 0.0
      %1443 = vmatprep.subr.mxu0 0.0
      %1444 = vmatpush1.msra.mxu0 0.0
      %1445 = vmatprep.subr.mxu0 0.0
      %1446 = vmatpush1.msra.mxu0 0.0
      %1447 = vmatprep.subr.mxu0 0.0
      %1448 = vmatpush1.msra.mxu0 0.0
      %1449 = vmatprep.subr.mxu0 0.0
      %1450 = vmatpush1.msra.mxu0 0.0
      %1451 = vmatprep.subr.mxu0 0.0
      %1452 = vmatpush1.msra.mxu0 0.0
      %1453 = vmatprep.subr.mxu0 0.0
      %1454 = vmatpush1.msra.mxu0 0.0
      %1455 = vmatprep.subr.mxu0 0.0
      %1456 = vmatpush1.msra.mxu0 0.0
      %1457 = vmatprep.subr.mxu0 0.0
      %1458 = vmatpush1.msra.mxu0 0.0
      %1459 = vmatprep.subr.mxu0 0.0
      %1460 = vmatpush1.msra.mxu0 0.0
      %1461 = vmatprep.subr.mxu0 0.0
      %1462 = vmatpush1.msra.mxu0 0.0
      %1463 = vmatprep.subr.mxu0 0.0
      %1464 = vmatpush1.msra.mxu0 0.0
      %1465 = vmatprep.subr.mxu0 0.0
      %1466 = vmatpush1.msra.mxu0 0.0
      %1467 = vmatprep.subr.mxu0 0.0
      %1468 = vmatpush1.msra.mxu0 0.0
      %1469 = vmatprep.subr.mxu0 0.0
      %1470 = vmatpush1.msra.mxu0 0.0
      %1471 = vmatprep.subr.mxu0 0.0
      %1472 = vmatpush1.msra.mxu0 0.0
      %1473 = vmatprep.subr.mxu0 0.0
      %1474 = vmatpush1.msra.mxu0 0.0
      %1475 = vmatprep.subr.mxu0 0.0
      %1476 = vmatpush1.msra.mxu0 0.0
      %1477 = vmatprep.subr.mxu0 0.0
      %1478 = vmatpush1.msra.mxu0 0.0
      %1479 = vmatprep.subr.mxu0 0.0
      %1480 = vmatpush1.msra.mxu0 0.0
      %1481 = vmatprep.subr.mxu0 0.0
      %1482 = vmatpush1.msra.mxu0 0.0
      %1483 = vmatprep.subr.mxu0 0.0
      %1484 = vmatpush1.msra.mxu0 0.0
      %1485 = vmatprep.subr.mxu0 0.0
      %1486 = vmatpush1.msra.mxu0 0.0
      %1487 = vmatprep.subr.mxu0 0.0
      %1488 = vmatpush1.msra.mxu0 0.0
      %1489 = vmatprep.mubr.f32.mxu0 0.0
      %1490 = vmatmul.mubr.f32.gmra.mrb[0].mxu0 %v1423
      %v1491 = vpop.f32.mrb[0].mxu0
      %v1492 = vadd.f32 0.0, %v1491
      %v1493 = vpop.f32.mrb[0].mxu0
      %1494 = vdwg.mxu0
      %v1496 = vsel %vm606, %v1269, 0
      %1498 = vmatprep.subr.mxu0 0.0
      %1499 = vmatpush1.msra.mxu0 %v1275
      %1500 = vmatprep.subr.mxu0 0.0
      %1501 = vmatpush1.msra.mxu0 0.0
      %1502 = vmatprep.subr.mxu0 0.0
      %1503 = vmatpush1.msra.mxu0 0.0
      %1504 = vmatprep.subr.mxu0 0.0
      %1505 = vmatpush1.msra.mxu0 0.0
      %1506 = vmatprep.subr.mxu0 0.0
      %1507 = vmatpush1.msra.mxu0 0.0
      %1508 = vmatprep.subr.mxu0 0.0
      %1509 = vmatpush1.msra.mxu0 0.0
      %1510 = vmatprep.subr.mxu0 0.0
      %1511 = vmatpush1.msra.mxu0 0.0
      %1512 = vmatprep.subr.mxu0 0.0
      %1513 = vmatpush1.msra.mxu0 0.0
      %1514 = vmatprep.subr.mxu0 0.0
      %1515 = vmatpush1.msra.mxu0 0.0
      %1516 = vmatprep.subr.mxu0 0.0
      %1517 = vmatpush1.msra.mxu0 0.0
      %1518 = vmatprep.subr.mxu0 0.0
      %1519 = vmatpush1.msra.mxu0 0.0
      %1520 = vmatprep.subr.mxu0 0.0
      %1521 = vmatpush1.msra.mxu0 0.0
      %1522 = vmatprep.subr.mxu0 0.0
      %1523 = vmatpush1.msra.mxu0 0.0
      %1524 = vmatprep.subr.mxu0 0.0
      %1525 = vmatpush1.msra.mxu0 0.0
      %1526 = vmatprep.subr.mxu0 0.0
      %1527 = vmatpush1.msra.mxu0 0.0
      %1528 = vmatprep.subr.mxu0 0.0
      %1529 = vmatpush1.msra.mxu0 0.0
      %1530 = vmatprep.subr.mxu0 0.0
      %1531 = vmatpush1.msra.mxu0 0.0
      %1532 = vmatprep.subr.mxu0 0.0
      %1533 = vmatpush1.msra.mxu0 0.0
      %1534 = vmatprep.subr.mxu0 0.0
      %1535 = vmatpush1.msra.mxu0 0.0
      %1536 = vmatprep.subr.mxu0 0.0
      %1537 = vmatpush1.msra.mxu0 0.0
      %1538 = vmatprep.subr.mxu0 0.0
      %1539 = vmatpush1.msra.mxu0 0.0
      %1540 = vmatprep.subr.mxu0 0.0
      %1541 = vmatpush1.msra.mxu0 0.0
      %1542 = vmatprep.subr.mxu0 0.0
      %1543 = vmatpush1.msra.mxu0 0.0
      %1544 = vmatprep.subr.mxu0 0.0
      %1545 = vmatpush1.msra.mxu0 0.0
      %1546 = vmatprep.subr.mxu0 0.0
      %1547 = vmatpush1.msra.mxu0 0.0
      %1548 = vmatprep.subr.mxu0 0.0
      %1549 = vmatpush1.msra.mxu0 0.0
      %1550 = vmatprep.subr.mxu0 0.0
      %1551 = vmatpush1.msra.mxu0 0.0
      %1552 = vmatprep.subr.mxu0 0.0
      %1553 = vmatpush1.msra.mxu0 0.0
      %1554 = vmatprep.subr.mxu0 0.0
      %1555 = vmatpush1.msra.mxu0 0.0
      %1556 = vmatprep.subr.mxu0 0.0
      %1557 = vmatpush1.msra.mxu0 0.0
      %1558 = vmatprep.subr.mxu0 0.0
      %1559 = vmatpush1.msra.mxu0 0.0
      %1560 = vmatprep.subr.mxu0 0.0
      %1561 = vmatpush1.msra.mxu0 0.0
      %1562 = vmatprep.mubr.f32.mxu0 0.0
      %1563 = vmatmul.mubr.f32.gmra.mrb[0].mxu0 %v1496
      %v1564 = vpop.f32.mrb[0].mxu0
      %v1565 = vadd.f32 0.0, %v1564
      %v1566 = vpop.f32.mrb[0].mxu0
      %1567 = vdwg.mxu0
      %v1568 = vsel %vm319, %v1346, 0.0
      %v1569 = vsel %vm319, %v1419, 0.0
      %v1570 = vadd.f32 %v1568, %v1569
      %v1571 = vsel %vm319, %v1492, 0.0
      %v1572 = vadd.f32 %v1570, %v1571
      %v1573 = vsel %vm319, %v1565, 0.0
      %v1574 = vadd.f32 %v1572, %v1573
      %v1575 = vld [vmem:[%s4] sm:$0x1]
      %v1577 = vlaneseq
      %v1578 = vshrl.u32 %v1577, 7
      %v1579 = vsub.s32 0, %v1578
      %v1580 = vrot.slane %v1575, %v1579
      %v1582 = vadd.f32 %v1574, %v1580
      %v1583 = vadd.f32 %v274, %v1582
      %v1584 = vsel %vm319, %v1583, 0.0
      %1585 = vadd.xlane.f32.xlu0 %v1584
      %v1586 = vpop.xlane.xlu0 %1585
      %v1587 = vrcp.pop 32.0
      %v1588 = vmul.f32 %v1586, %v1587
      %v1589 = vsub.f32 %v1583, %v1588
      %v1590 = vmul.f32 %v1589, %v1589
      %v1591 = vsel %vm319, %v1590, 0.0
      %1592 = vadd.xlane.f32.xlu0 %v1591
      %v1593 = vpop.xlane.xlu0 %1592
      %v1594 = vmul.f32 %v1593, %v1587
      %v1595 = vadd.f32 %v1594, 1e-05
      %v1596 = vrsqrt.pop %v1595
      %v1597 = vmul.f32 %v1589, %v1596
      %v1598 = vld [vmem:[%s5] sm:$0x1]
      %v1600 = vlaneseq
      %v1601 = vshrl.u32 %v1600, 7
      %v1602 = vsub.s32 0, %v1601
      %v1603 = vrot.slane %v1598, %v1602
      %v1605 = vmul.f32 %v1597, %v1603
      %v1606 = vld [vmem:[%s6] sm:$0x1]
      %v1608 = vlaneseq
      %v1609 = vshrl.u32 %v1608, 7
      %v1610 = vsub.s32 0, %v1609
      %v1611 = vrot.slane %v1606, %v1610
      %v1613 = vadd.f32 %v1605, %v1611
      %1614 = vst.msk [vmem:[%s273] sm:$0xff] %vm319, %v1613
      %p1615 = scmp.lt.s32.totalorder %s18, 1
      %s1616 = scalar_select %p1615, %s18, 1
      %s1617 = smul.addr %s1616, 8
      %s1618 = scalar_lea.vmem %s7, %s1617
      // Predicated region
      $region49: #{attention_block.1} parent=47 // pred_check
        %p1619 = pneg %p188
      $region50: #{attention_block.1} parent=47 // pred_check_branch
        %1621 = sbr.rel (%p1619) target = $region52
      $region51: #{attention_block.1} parent=47 // pred_region
        _
      $region52: #{attention_block.1} parent=47 // pred_fallthru
        _
    $region48: #{attention_block.1} parent=5 // pred_fallthru
      _
    %p1622 = scmp.le.s32.totalorder 2, %s13
    // Predicated region
    $region53: #{attention_block.1} parent=5 // pred_check
      %p1623 = pneg %p1622
    $region54: #{attention_block.1} parent=5 // pred_check_branch
      %1625 = sbr.rel (%p1623) target = $region56
    $region55: #{attention_block.1} parent=5 // pred_region
      %s1626 = ssub.s32 %s13, 2
      // Predicated region
      $region57: #{attention_block.1} parent=55 // pred_check
        %p1627 = pneg %p194
      $region58: #{attention_block.1} parent=55 // pred_check_branch
        %1629 = sbr.rel (%p1627) target = $region60
      $region59: #{attention_block.1} parent=55 // pred_region
        %p1630 = scmp.lt.s32.totalorder %s19, 1
        %s1631 = scalar_select %p1630, %s19, 1
        %s1632 = smul.addr %s1631, 8
        %s1633 = scalar_lea.vmem %s7, %s1632
      $region60: #{attention_block.1} parent=55 // pred_fallthru
        _
    $region56: #{attention_block.1} parent=5 // pred_fallthru
      _
  $region6: #{attention_block.1} parent=0 // loop_footer
    %s17 = sadd.s32 1, %s13
  $region7: #{attention_block.1} parent=0 // loop_footer_branch
    %12 = sbr.rel target = $region3
  $region8: #{attention_block.1} parent=0 // loop_exit
    _

</llo_original>
